<compile_context>
chip_gen: v6e
topology: v6e:2x2x1
jax: 0.10.0
libtpu: 0.0.40
codegen_flags: <defaults>
</compile_context>

<pallas_src>
import jax
import jax.numpy as jnp
from jax import lax
from jax.experimental import pallas as pl
from jax.experimental.pallas import tpu as pltpu

# ---------------- sizes (small, consistent with the module) ----------------
B = 2          # batch per view
C_IN = 4       # input image channels
H = W = 16     # spatial
HW = H * W
FEAT = 32      # backbone.output_dim (stand-in for resnet fc.in_features)
PROJ_HID = 64  # projection_MLP hidden_dim (=2048 in the original)
PROJ_OUT = 64  # projection_MLP out_dim    (=2048 in the original)
PRED_HID = 32  # prediction_MLP hidden_dim (=512  in the original)
PRED_OUT = 64  # prediction_MLP out_dim    (=2048 in the original)
EPS = 1e-5


# ---------------------------- Pallas kernel ---------------------------------
def _bn_train(y, gamma, beta):
    """PyTorch BatchNorm1d training-mode forward, single-pass stats, folded scale."""
    mean = jnp.mean(y, axis=0, keepdims=True)
    var = jnp.mean(y * y, axis=0, keepdims=True) - mean * mean
    scale = gamma * lax.rsqrt(var + EPS)          # (1, D), rsqrt on EUP
    shift = beta - mean * scale                   # (1, D)
    return y * scale + shift                      # one mul + one add per element


def simsiam_fused_kernel(
    x_ref,                                  # (B*H*W, C_IN)   current view, channels-last
    bw_ref, bb_ref,                         # backbone 1x1 conv
    w1_ref, b1_ref, g1_ref, be1_ref,        # projection layer1
    w2_ref, b2_ref, g2_ref, be2_ref,        # projection layer2
    w3_ref, b3_ref, g3_ref, be3_ref,        # projection layer3
    pw1_ref, pb1_ref, pg1_ref, pbe1_ref,    # prediction layer1
    pw2_ref, pb2_ref,                       # prediction layer2
    zp_ref,                                 # (B, PROJ_OUT + PRED_OUT)  packed [z | p]
):
    # ---- stand-in backbone: 1x1 conv as one 2-D matmul + ReLU + global avg pool ----
    x = x_ref[...]                                                     # (B*HW, C)
    y = jnp.dot(x, bw_ref[...], preferred_element_type=jnp.float32) + bb_ref[...]
    y = jnp.maximum(y, 0.0)                                            # (B*HW, FEAT)
    feat = jnp.mean(y.reshape(B, HW, FEAT), axis=1)                    # (B, FEAT)

    # ---- projection_MLP ----
    h = jnp.dot(feat, w1_ref[...], preferred_element_type=jnp.float32) + b1_ref[...]
    h = jnp.maximum(_bn_train(h, g1_ref[...], be1_ref[...]), 0.0)

    h = jnp.dot(h, w2_ref[...], preferred_element_type=jnp.float32) + b2_ref[...]
    h = jnp.maximum(_bn_train(h, g2_ref[...], be2_ref[...]), 0.0)

    z = jnp.dot(h, w3_ref[...], preferred_element_type=jnp.float32) + b3_ref[...]
    z = _bn_train(z, g3_ref[...], be3_ref[...])                        # (B, PROJ_OUT)

    # ---- prediction_MLP ----
    q = jnp.dot(z, pw1_ref[...], preferred_element_type=jnp.float32) + pb1_ref[...]
    q = jnp.maximum(_bn_train(q, pg1_ref[...], pbe1_ref[...]), 0.0)

    p = jnp.dot(q, pw2_ref[...], preferred_element_type=jnp.float32) + pb2_ref[...]

    # lane-dense packed store: (B, 64) | (B, 64) -> (B, 128)
    zp_ref[...] = jnp.concatenate([z, p], axis=-1)


# ------------------------------ wrapper --------------------------------------
def _resident_spec(shape):
    """Whole-array VMEM block whose index_map ignores the view grid index."""
    return pl.BlockSpec(shape, lambda v: (0,) * len(shape))


def simsiam_forward(x1, x2, params):
    """Returns (p1, p2, z1.detach(), z2.detach()) like SimSiam.forward."""
    b = x1.shape[0]
    # Stack views, do NCHW -> (view, B*H*W, C) layout change once in XLA.
    x = jnp.stack([x1, x2], axis=0)                       # (2, B, C, H, W)
    x = jnp.transpose(x, (0, 1, 3, 4, 2))                 # (2, B, H, W, C)
    x = x.reshape(2, b * H * W, C_IN)                     # (2, B*HW, C)

    flat_params = params["backbone"] + params["mlp"]      # 20 arrays

    in_specs = [pl.BlockSpec((None, b * H * W, C_IN), lambda v: (v, 0, 0))]
    in_specs += [_resident_spec(p.shape) for p in flat_params]

    zp = pl.pallas_call(
        simsiam_fused_kernel,
        out_shape=jax.ShapeDtypeStruct((2, b, PROJ_OUT + PRED_OUT), jnp.float32),
        grid=(2,),
        in_specs=in_specs,
        out_specs=pl.BlockSpec((None, b, PROJ_OUT + PRED_OUT), lambda v: (v, 0, 0)),
        compiler_params=pltpu.CompilerParams(dimension_semantics=("parallel",)),
    )(x, *flat_params)

    z = zp[..., :PROJ_OUT]                                # (2, B, PROJ_OUT)
    p = zp[..., PROJ_OUT:]                                # (2, B, PRED_OUT)
    return p[0], p[1], lax.stop_gradient(z[0]), lax.stop_gradient(z[1])


# ------------------------------ param init ----------------------------------
def init_params(key):
    ks = jax.random.split(key, 8)
    scale = 0.05

    def lin(k, din, dout):
        kw, kb = jax.random.split(k)
        w = scale * jax.random.normal(kw, (din, dout), jnp.float32)
        bias = scale * jax.random.normal(kb, (1, dout), jnp.float32)
        return w, bias

    def bn(d):
        # PyTorch BatchNorm1d default init: weight=1, bias=0
        return jnp.ones((1, d), jnp.float32), jnp.zeros((1, d), jnp.float32)

    # backbone stand-in (1x1 conv)
    bw, bb = lin(ks[0], C_IN, FEAT)

    # projection_MLP
    w1, b1 = lin(ks[1], FEAT, PROJ_HID)
    g1, be1 = bn(PROJ_HID)
    w2, b2 = lin(ks[2], PROJ_HID, PROJ_HID)
    g2, be2 = bn(PROJ_HID)
    w3, b3 = lin(ks[3], PROJ_HID, PROJ_OUT)
    g3, be3 = bn(PROJ_OUT)  # BatchNorm1d(hidden_dim), hidden_dim == out_dim here

    # prediction_MLP
    pw1, pb1 = lin(ks[4], PROJ_OUT, PRED_HID)
    pg1, pbe1 = bn(PRED_HID)
    pw2, pb2 = lin(ks[5], PRED_HID, PRED_OUT)

    mlp = (w1, b1, g1, be1,
           w2, b2, g2, be2,
           w3, b3, g3, be3,
           pw1, pb1, pg1, pbe1,
           pw2, pb2)
    return {"backbone": (bw, bb), "mlp": mlp}


# --------------------------------- main --------------------------------------
if __name__ == "__main__":
    key = jax.random.PRNGKey(0)
    kx1, kx2, kp = jax.random.split(key, 3)

    x1 = jax.random.normal(kx1, (B, C_IN, H, W), jnp.float32)  # NCHW like PyTorch
    x2 = jax.random.normal(kx2, (B, C_IN, H, W), jnp.float32)
    params = init_params(kp)

    p1, p2, z1, z2 = jax.jit(simsiam_forward)(x1, x2, params)
    jax.block_until_ready((p1, p2, z1, z2))

    assert p1.shape == (B, PRED_OUT) and p2.shape == (B, PRED_OUT)
    assert z1.shape == (B, PROJ_OUT) and z2.shape == (B, PROJ_OUT)
    assert jnp.all(jnp.isfinite(p1)) and jnp.all(jnp.isfinite(p2))
    assert jnp.all(jnp.isfinite(z1)) and jnp.all(jnp.isfinite(z2))
    print("KERNEL_OK")
</pallas_src>

<mosaic_0001>
module attributes {stable_mosaic.version = 11 : i64} {
  func.func @simsiam_fused_kernel(%arg0: i32, %arg1: memref<1x512x4xf32, #tpu.memory_space<vmem>>, %arg2: memref<4x32xf32, #tpu.memory_space<vmem>>, %arg3: memref<1x32xf32, #tpu.memory_space<vmem>>, %arg4: memref<32x64xf32, #tpu.memory_space<vmem>>, %arg5: memref<1x64xf32, #tpu.memory_space<vmem>>, %arg6: memref<1x64xf32, #tpu.memory_space<vmem>>, %arg7: memref<1x64xf32, #tpu.memory_space<vmem>>, %arg8: memref<64x64xf32, #tpu.memory_space<vmem>>, %arg9: memref<1x64xf32, #tpu.memory_space<vmem>>, %arg10: memref<1x64xf32, #tpu.memory_space<vmem>>, %arg11: memref<1x64xf32, #tpu.memory_space<vmem>>, %arg12: memref<64x64xf32, #tpu.memory_space<vmem>>, %arg13: memref<1x64xf32, #tpu.memory_space<vmem>>, %arg14: memref<1x64xf32, #tpu.memory_space<vmem>>, %arg15: memref<1x64xf32, #tpu.memory_space<vmem>>, %arg16: memref<64x32xf32, #tpu.memory_space<vmem>>, %arg17: memref<1x32xf32, #tpu.memory_space<vmem>>, %arg18: memref<1x32xf32, #tpu.memory_space<vmem>>, %arg19: memref<1x32xf32, #tpu.memory_space<vmem>>, %arg20: memref<32x64xf32, #tpu.memory_space<vmem>>, %arg21: memref<1x64xf32, #tpu.memory_space<vmem>>, %arg22: memref<1x2x128xf32, #tpu.memory_space<vmem>>) attributes {dimension_semantics = [#tpu.dimension_semantics<parallel>], iteration_bounds = array<i64: 2>, scalar_prefetch = 0 : i64, scratch_operands = 0 : i64, tpu.core_type = #tpu.core_type<tc>, window_params = [{transform_indices = @transform_0, window_bounds = array<i64: 1, 512, 4>}, {pipeline_mode = #tpu.pipeline_mode<synchronous>, transform_indices = @transform_1, window_bounds = array<i64: 4, 32>}, {pipeline_mode = #tpu.pipeline_mode<synchronous>, transform_indices = @transform_2, window_bounds = array<i64: 1, 32>}, {pipeline_mode = #tpu.pipeline_mode<synchronous>, transform_indices = @transform_3, window_bounds = array<i64: 32, 64>}, {pipeline_mode = #tpu.pipeline_mode<synchronous>, transform_indices = @transform_4, window_bounds = array<i64: 1, 64>}, {pipeline_mode = #tpu.pipeline_mode<synchronous>, transform_indices = @transform_5, window_bounds = array<i64: 1, 64>}, {pipeline_mode = #tpu.pipeline_mode<synchronous>, transform_indices = @transform_6, window_bounds = array<i64: 1, 64>}, {pipeline_mode = #tpu.pipeline_mode<synchronous>, transform_indices = @transform_7, window_bounds = array<i64: 64, 64>}, {pipeline_mode = #tpu.pipeline_mode<synchronous>, transform_indices = @transform_8, window_bounds = array<i64: 1, 64>}, {pipeline_mode = #tpu.pipeline_mode<synchronous>, transform_indices = @transform_9, window_bounds = array<i64: 1, 64>}, {pipeline_mode = #tpu.pipeline_mode<synchronous>, transform_indices = @transform_10, window_bounds = array<i64: 1, 64>}, {pipeline_mode = #tpu.pipeline_mode<synchronous>, transform_indices = @transform_11, window_bounds = array<i64: 64, 64>}, {pipeline_mode = #tpu.pipeline_mode<synchronous>, transform_indices = @transform_12, window_bounds = array<i64: 1, 64>}, {pipeline_mode = #tpu.pipeline_mode<synchronous>, transform_indices = @transform_13, window_bounds = array<i64: 1, 64>}, {pipeline_mode = #tpu.pipeline_mode<synchronous>, transform_indices = @transform_14, window_bounds = array<i64: 1, 64>}, {pipeline_mode = #tpu.pipeline_mode<synchronous>, transform_indices = @transform_15, window_bounds = array<i64: 64, 32>}, {pipeline_mode = #tpu.pipeline_mode<synchronous>, transform_indices = @transform_16, window_bounds = array<i64: 1, 32>}, {pipeline_mode = #tpu.pipeline_mode<synchronous>, transform_indices = @transform_17, window_bounds = array<i64: 1, 32>}, {pipeline_mode = #tpu.pipeline_mode<synchronous>, transform_indices = @transform_18, window_bounds = array<i64: 1, 32>}, {pipeline_mode = #tpu.pipeline_mode<synchronous>, transform_indices = @transform_19, window_bounds = array<i64: 32, 64>}, {pipeline_mode = #tpu.pipeline_mode<synchronous>, transform_indices = @transform_20, window_bounds = array<i64: 1, 64>}, {transform_indices = @transform_21, window_bounds = array<i64: 1, 2, 128>}]} {
    %c0 = arith.constant 0 : index
    %c0_0 = arith.constant 0 : index
    %c0_1 = arith.constant 0 : index
    %0 = vector.load %arg1[%c0, %c0_0, %c0_1] : memref<1x512x4xf32, #tpu.memory_space<vmem>>, vector<1x512x4xf32>
    %1 = vector.shape_cast %0 : vector<1x512x4xf32> to vector<512x4xf32>
    %c0_2 = arith.constant 0 : index
    %c0_3 = arith.constant 0 : index
    %2 = vector.load %arg2[%c0_2, %c0_3] : memref<4x32xf32, #tpu.memory_space<vmem>>, vector<4x32xf32>
    %cst = arith.constant dense<0.000000e+00> : vector<512x32xf32>
    %3 = tpu.matmul %1, %2, %cst {dimension_numbers = #tpu.dot_dimension_numbers<[1], [0], [0], [1], [0, 0, 1, 1], [], []>} : vector<512x4xf32>, vector<4x32xf32>, vector<512x32xf32> -> vector<512x32xf32>
    %c0_4 = arith.constant 0 : index
    %c0_5 = arith.constant 0 : index
    %4 = vector.load %arg3[%c0_4, %c0_5] : memref<1x32xf32, #tpu.memory_space<vmem>>, vector<1x32xf32>
    %5 = vector.broadcast %4 : vector<1x32xf32> to vector<512x32xf32>
    %6 = arith.addf %3, %5 : vector<512x32xf32>
    %cst_6 = arith.constant 0.000000e+00 : f32
    %7 = vector.broadcast %cst_6 : f32 to vector<512x32xf32>
    %8 = arith.maximumf %6, %7 : vector<512x32xf32>
    %9 = vector.shape_cast %8 : vector<512x32xf32> to vector<2x256x32xf32>
    %cst_7 = arith.constant dense<0.000000e+00> : vector<2x32xf32>
    %10 = vector.multi_reduction <add>, %9, %cst_7 [1] : vector<2x256x32xf32> to vector<2x32xf32>
    %cst_8 = arith.constant 2.560000e+02 : f32
    %11 = vector.broadcast %cst_8 : f32 to vector<2x32xf32>
    %12 = arith.divf %10, %11 : vector<2x32xf32>
    %c0_9 = arith.constant 0 : index
    %c0_10 = arith.constant 0 : index
    %13 = vector.load %arg4[%c0_9, %c0_10] : memref<32x64xf32, #tpu.memory_space<vmem>>, vector<32x64xf32>
    %cst_11 = arith.constant dense<0.000000e+00> : vector<2x64xf32>
    %14 = tpu.matmul %12, %13, %cst_11 {dimension_numbers = #tpu.dot_dimension_numbers<[1], [0], [0], [1], [0, 0, 1, 1], [], []>} : vector<2x32xf32>, vector<32x64xf32>, vector<2x64xf32> -> vector<2x64xf32>
    %c0_12 = arith.constant 0 : index
    %c0_13 = arith.constant 0 : index
    %15 = vector.load %arg5[%c0_12, %c0_13] : memref<1x64xf32, #tpu.memory_space<vmem>>, vector<1x64xf32>
    %16 = vector.broadcast %15 : vector<1x64xf32> to vector<2x64xf32>
    %17 = arith.addf %14, %16 : vector<2x64xf32>
    %c0_14 = arith.constant 0 : index
    %c0_15 = arith.constant 0 : index
    %18 = vector.load %arg6[%c0_14, %c0_15] : memref<1x64xf32, #tpu.memory_space<vmem>>, vector<1x64xf32>
    %c0_16 = arith.constant 0 : index
    %c0_17 = arith.constant 0 : index
    %19 = vector.load %arg7[%c0_16, %c0_17] : memref<1x64xf32, #tpu.memory_space<vmem>>, vector<1x64xf32>
    %cst_18 = arith.constant dense<0.000000e+00> : vector<64xf32>
    %20 = vector.multi_reduction <add>, %17, %cst_18 [0] : vector<2x64xf32> to vector<64xf32>
    %21 = vector.shape_cast %20 : vector<64xf32> to vector<1x64xf32>
    %cst_19 = arith.constant 2.000000e+00 : f32
    %22 = vector.broadcast %cst_19 : f32 to vector<1x64xf32>
    %23 = arith.divf %21, %22 : vector<1x64xf32>
    %24 = arith.mulf %17, %17 : vector<2x64xf32>
    %cst_20 = arith.constant dense<0.000000e+00> : vector<64xf32>
    %25 = vector.multi_reduction <add>, %24, %cst_20 [0] : vector<2x64xf32> to vector<64xf32>
    %26 = vector.shape_cast %25 : vector<64xf32> to vector<1x64xf32>
    %cst_21 = arith.constant 2.000000e+00 : f32
    %27 = vector.broadcast %cst_21 : f32 to vector<1x64xf32>
    %28 = arith.divf %26, %27 : vector<1x64xf32>
    %29 = arith.mulf %23, %23 : vector<1x64xf32>
    %30 = arith.subf %28, %29 : vector<1x64xf32>
    %cst_22 = arith.constant 9.99999974E-6 : f32
    %31 = vector.broadcast %cst_22 : f32 to vector<1x64xf32>
    %32 = arith.addf %30, %31 : vector<1x64xf32>
    %33 = math.rsqrt %32 : vector<1x64xf32>
    %34 = arith.mulf %18, %33 : vector<1x64xf32>
    %35 = arith.mulf %23, %34 : vector<1x64xf32>
    %36 = arith.subf %19, %35 : vector<1x64xf32>
    %37 = vector.broadcast %34 : vector<1x64xf32> to vector<2x64xf32>
    %38 = arith.mulf %17, %37 : vector<2x64xf32>
    %39 = vector.broadcast %36 : vector<1x64xf32> to vector<2x64xf32>
    %40 = arith.addf %38, %39 : vector<2x64xf32>
    %cst_23 = arith.constant 0.000000e+00 : f32
    %41 = vector.broadcast %cst_23 : f32 to vector<2x64xf32>
    %42 = arith.maximumf %40, %41 : vector<2x64xf32>
    %c0_24 = arith.constant 0 : index
    %c0_25 = arith.constant 0 : index
    %43 = vector.load %arg8[%c0_24, %c0_25] : memref<64x64xf32, #tpu.memory_space<vmem>>, vector<64x64xf32>
    %cst_26 = arith.constant dense<0.000000e+00> : vector<2x64xf32>
    %44 = tpu.matmul %42, %43, %cst_26 {dimension_numbers = #tpu.dot_dimension_numbers<[1], [0], [0], [1], [0, 0, 1, 1], [], []>} : vector<2x64xf32>, vector<64x64xf32>, vector<2x64xf32> -> vector<2x64xf32>
    %c0_27 = arith.constant 0 : index
    %c0_28 = arith.constant 0 : index
    %45 = vector.load %arg9[%c0_27, %c0_28] : memref<1x64xf32, #tpu.memory_space<vmem>>, vector<1x64xf32>
    %46 = vector.broadcast %45 : vector<1x64xf32> to vector<2x64xf32>
    %47 = arith.addf %44, %46 : vector<2x64xf32>
    %c0_29 = arith.constant 0 : index
    %c0_30 = arith.constant 0 : index
    %48 = vector.load %arg10[%c0_29, %c0_30] : memref<1x64xf32, #tpu.memory_space<vmem>>, vector<1x64xf32>
    %c0_31 = arith.constant 0 : index
    %c0_32 = arith.constant 0 : index
    %49 = vector.load %arg11[%c0_31, %c0_32] : memref<1x64xf32, #tpu.memory_space<vmem>>, vector<1x64xf32>
    %cst_33 = arith.constant dense<0.000000e+00> : vector<64xf32>
    %50 = vector.multi_reduction <add>, %47, %cst_33 [0] : vector<2x64xf32> to vector<64xf32>
    %51 = vector.shape_cast %50 : vector<64xf32> to vector<1x64xf32>
    %cst_34 = arith.constant 2.000000e+00 : f32
    %52 = vector.broadcast %cst_34 : f32 to vector<1x64xf32>
    %53 = arith.divf %51, %52 : vector<1x64xf32>
    %54 = arith.mulf %47, %47 : vector<2x64xf32>
    %cst_35 = arith.constant dense<0.000000e+00> : vector<64xf32>
    %55 = vector.multi_reduction <add>, %54, %cst_35 [0] : vector<2x64xf32> to vector<64xf32>
    %56 = vector.shape_cast %55 : vector<64xf32> to vector<1x64xf32>
    %cst_36 = arith.constant 2.000000e+00 : f32
    %57 = vector.broadcast %cst_36 : f32 to vector<1x64xf32>
    %58 = arith.divf %56, %57 : vector<1x64xf32>
    %59 = arith.mulf %53, %53 : vector<1x64xf32>
    %60 = arith.subf %58, %59 : vector<1x64xf32>
    %cst_37 = arith.constant 9.99999974E-6 : f32
    %61 = vector.broadcast %cst_37 : f32 to vector<1x64xf32>
    %62 = arith.addf %60, %61 : vector<1x64xf32>
    %63 = math.rsqrt %62 : vector<1x64xf32>
    %64 = arith.mulf %48, %63 : vector<1x64xf32>
    %65 = arith.mulf %53, %64 : vector<1x64xf32>
    %66 = arith.subf %49, %65 : vector<1x64xf32>
    %67 = vector.broadcast %64 : vector<1x64xf32> to vector<2x64xf32>
    %68 = arith.mulf %47, %67 : vector<2x64xf32>
    %69 = vector.broadcast %66 : vector<1x64xf32> to vector<2x64xf32>
    %70 = arith.addf %68, %69 : vector<2x64xf32>
    %cst_38 = arith.constant 0.000000e+00 : f32
    %71 = vector.broadcast %cst_38 : f32 to vector<2x64xf32>
    %72 = arith.maximumf %70, %71 : vector<2x64xf32>
    %c0_39 = arith.constant 0 : index
    %c0_40 = arith.constant 0 : index
    %73 = vector.load %arg12[%c0_39, %c0_40] : memref<64x64xf32, #tpu.memory_space<vmem>>, vector<64x64xf32>
    %cst_41 = arith.constant dense<0.000000e+00> : vector<2x64xf32>
    %74 = tpu.matmul %72, %73, %cst_41 {dimension_numbers = #tpu.dot_dimension_numbers<[1], [0], [0], [1], [0, 0, 1, 1], [], []>} : vector<2x64xf32>, vector<64x64xf32>, vector<2x64xf32> -> vector<2x64xf32>
    %c0_42 = arith.constant 0 : index
    %c0_43 = arith.constant 0 : index
    %75 = vector.load %arg13[%c0_42, %c0_43] : memref<1x64xf32, #tpu.memory_space<vmem>>, vector<1x64xf32>
    %76 = vector.broadcast %75 : vector<1x64xf32> to vector<2x64xf32>
    %77 = arith.addf %74, %76 : vector<2x64xf32>
    %c0_44 = arith.constant 0 : index
    %c0_45 = arith.constant 0 : index
    %78 = vector.load %arg14[%c0_44, %c0_45] : memref<1x64xf32, #tpu.memory_space<vmem>>, vector<1x64xf32>
    %c0_46 = arith.constant 0 : index
    %c0_47 = arith.constant 0 : index
    %79 = vector.load %arg15[%c0_46, %c0_47] : memref<1x64xf32, #tpu.memory_space<vmem>>, vector<1x64xf32>
    %cst_48 = arith.constant dense<0.000000e+00> : vector<64xf32>
    %80 = vector.multi_reduction <add>, %77, %cst_48 [0] : vector<2x64xf32> to vector<64xf32>
    %81 = vector.shape_cast %80 : vector<64xf32> to vector<1x64xf32>
    %cst_49 = arith.constant 2.000000e+00 : f32
    %82 = vector.broadcast %cst_49 : f32 to vector<1x64xf32>
    %83 = arith.divf %81, %82 : vector<1x64xf32>
    %84 = arith.mulf %77, %77 : vector<2x64xf32>
    %cst_50 = arith.constant dense<0.000000e+00> : vector<64xf32>
    %85 = vector.multi_reduction <add>, %84, %cst_50 [0] : vector<2x64xf32> to vector<64xf32>
    %86 = vector.shape_cast %85 : vector<64xf32> to vector<1x64xf32>
    %cst_51 = arith.constant 2.000000e+00 : f32
    %87 = vector.broadcast %cst_51 : f32 to vector<1x64xf32>
    %88 = arith.divf %86, %87 : vector<1x64xf32>
    %89 = arith.mulf %83, %83 : vector<1x64xf32>
    %90 = arith.subf %88, %89 : vector<1x64xf32>
    %cst_52 = arith.constant 9.99999974E-6 : f32
    %91 = vector.broadcast %cst_52 : f32 to vector<1x64xf32>
    %92 = arith.addf %90, %91 : vector<1x64xf32>
    %93 = math.rsqrt %92 : vector<1x64xf32>
    %94 = arith.mulf %78, %93 : vector<1x64xf32>
    %95 = arith.mulf %83, %94 : vector<1x64xf32>
    %96 = arith.subf %79, %95 : vector<1x64xf32>
    %97 = vector.broadcast %94 : vector<1x64xf32> to vector<2x64xf32>
    %98 = arith.mulf %77, %97 : vector<2x64xf32>
    %99 = vector.broadcast %96 : vector<1x64xf32> to vector<2x64xf32>
    %100 = arith.addf %98, %99 : vector<2x64xf32>
    %c0_53 = arith.constant 0 : index
    %c0_54 = arith.constant 0 : index
    %101 = vector.load %arg16[%c0_53, %c0_54] : memref<64x32xf32, #tpu.memory_space<vmem>>, vector<64x32xf32>
    %cst_55 = arith.constant dense<0.000000e+00> : vector<2x32xf32>
    %102 = tpu.matmul %100, %101, %cst_55 {dimension_numbers = #tpu.dot_dimension_numbers<[1], [0], [0], [1], [0, 0, 1, 1], [], []>} : vector<2x64xf32>, vector<64x32xf32>, vector<2x32xf32> -> vector<2x32xf32>
    %c0_56 = arith.constant 0 : index
    %c0_57 = arith.constant 0 : index
    %103 = vector.load %arg17[%c0_56, %c0_57] : memref<1x32xf32, #tpu.memory_space<vmem>>, vector<1x32xf32>
    %104 = vector.broadcast %103 : vector<1x32xf32> to vector<2x32xf32>
    %105 = arith.addf %102, %104 : vector<2x32xf32>
    %c0_58 = arith.constant 0 : index
    %c0_59 = arith.constant 0 : index
    %106 = vector.load %arg18[%c0_58, %c0_59] : memref<1x32xf32, #tpu.memory_space<vmem>>, vector<1x32xf32>
    %c0_60 = arith.constant 0 : index
    %c0_61 = arith.constant 0 : index
    %107 = vector.load %arg19[%c0_60, %c0_61] : memref<1x32xf32, #tpu.memory_space<vmem>>, vector<1x32xf32>
    %cst_62 = arith.constant dense<0.000000e+00> : vector<32xf32>
    %108 = vector.multi_reduction <add>, %105, %cst_62 [0] : vector<2x32xf32> to vector<32xf32>
    %109 = vector.shape_cast %108 : vector<32xf32> to vector<1x32xf32>
    %cst_63 = arith.constant 2.000000e+00 : f32
    %110 = vector.broadcast %cst_63 : f32 to vector<1x32xf32>
    %111 = arith.divf %109, %110 : vector<1x32xf32>
    %112 = arith.mulf %105, %105 : vector<2x32xf32>
    %cst_64 = arith.constant dense<0.000000e+00> : vector<32xf32>
    %113 = vector.multi_reduction <add>, %112, %cst_64 [0] : vector<2x32xf32> to vector<32xf32>
    %114 = vector.shape_cast %113 : vector<32xf32> to vector<1x32xf32>
    %cst_65 = arith.constant 2.000000e+00 : f32
    %115 = vector.broadcast %cst_65 : f32 to vector<1x32xf32>
    %116 = arith.divf %114, %115 : vector<1x32xf32>
    %117 = arith.mulf %111, %111 : vector<1x32xf32>
    %118 = arith.subf %116, %117 : vector<1x32xf32>
    %cst_66 = arith.constant 9.99999974E-6 : f32
    %119 = vector.broadcast %cst_66 : f32 to vector<1x32xf32>
    %120 = arith.addf %118, %119 : vector<1x32xf32>
    %121 = math.rsqrt %120 : vector<1x32xf32>
    %122 = arith.mulf %106, %121 : vector<1x32xf32>
    %123 = arith.mulf %111, %122 : vector<1x32xf32>
    %124 = arith.subf %107, %123 : vector<1x32xf32>
    %125 = vector.broadcast %122 : vector<1x32xf32> to vector<2x32xf32>
    %126 = arith.mulf %105, %125 : vector<2x32xf32>
    %127 = vector.broadcast %124 : vector<1x32xf32> to vector<2x32xf32>
    %128 = arith.addf %126, %127 : vector<2x32xf32>
    %cst_67 = arith.constant 0.000000e+00 : f32
    %129 = vector.broadcast %cst_67 : f32 to vector<2x32xf32>
    %130 = arith.maximumf %128, %129 : vector<2x32xf32>
    %c0_68 = arith.constant 0 : index
    %c0_69 = arith.constant 0 : index
    %131 = vector.load %arg20[%c0_68, %c0_69] : memref<32x64xf32, #tpu.memory_space<vmem>>, vector<32x64xf32>
    %cst_70 = arith.constant dense<0.000000e+00> : vector<2x64xf32>
    %132 = tpu.matmul %130, %131, %cst_70 {dimension_numbers = #tpu.dot_dimension_numbers<[1], [0], [0], [1], [0, 0, 1, 1], [], []>} : vector<2x32xf32>, vector<32x64xf32>, vector<2x64xf32> -> vector<2x64xf32>
    %c0_71 = arith.constant 0 : index
    %c0_72 = arith.constant 0 : index
    %133 = vector.load %arg21[%c0_71, %c0_72] : memref<1x64xf32, #tpu.memory_space<vmem>>, vector<1x64xf32>
    %134 = vector.broadcast %133 : vector<1x64xf32> to vector<2x64xf32>
    %135 = arith.addf %132, %134 : vector<2x64xf32>
    %136 = tpu.concatenate %100, %135 in 1 : vector<2x64xf32>, vector<2x64xf32> -> vector<2x128xf32>
    %c0_73 = arith.constant 0 : index
    %c0_74 = arith.constant 0 : index
    %c0_75 = arith.constant 0 : index
    %137 = vector.load %arg22[%c0_73, %c0_74, %c0_75] : memref<1x2x128xf32, #tpu.memory_space<vmem>>, vector<1x2x128xf32>
    %138 = vector.shape_cast %137 : vector<1x2x128xf32> to vector<2x128xf32>
    %139 = vector.shape_cast %136 : vector<2x128xf32> to vector<1x2x128xf32>
    tpu.vector_store %arg22[%c0_73, %c0_74, %c0_75], %139 {strides = array<i32>} : memref<1x2x128xf32, #tpu.memory_space<vmem>>, vector<1x2x128xf32>,
    return
  }
  func.func @transform_0(%arg0: i32) -> (i32, i32, i32) {
    %c0_i32 = arith.constant 0 : i32
    %c0_i32_0 = arith.constant 0 : i32
    %c0_i32_1 = arith.constant 0 : i32
    return %arg0, %c0_i32, %c0_i32_0 : i32, i32, i32
  }
  func.func @transform_1(%arg0: i32) -> (i32, i32) {
    %c0_i32 = arith.constant 0 : i32
    %c0_i32_0 = arith.constant 0 : i32
    %c0_i32_1 = arith.constant 0 : i32
    return %c0_i32, %c0_i32_0 : i32, i32
  }
  func.func @transform_2(%arg0: i32) -> (i32, i32) {
    %c0_i32 = arith.constant 0 : i32
    %c0_i32_0 = arith.constant 0 : i32
    %c0_i32_1 = arith.constant 0 : i32
    return %c0_i32, %c0_i32_0 : i32, i32
  }
  func.func @transform_3(%arg0: i32) -> (i32, i32) {
    %c0_i32 = arith.constant 0 : i32
    %c0_i32_0 = arith.constant 0 : i32
    %c0_i32_1 = arith.constant 0 : i32
    return %c0_i32, %c0_i32_0 : i32, i32
  }
  func.func @transform_4(%arg0: i32) -> (i32, i32) {
    %c0_i32 = arith.constant 0 : i32
    %c0_i32_0 = arith.constant 0 : i32
    %c0_i32_1 = arith.constant 0 : i32
    return %c0_i32, %c0_i32_0 : i32, i32
  }
  func.func @transform_5(%arg0: i32) -> (i32, i32) {
    %c0_i32 = arith.constant 0 : i32
    %c0_i32_0 = arith.constant 0 : i32
    %c0_i32_1 = arith.constant 0 : i32
    return %c0_i32, %c0_i32_0 : i32, i32
  }
  func.func @transform_6(%arg0: i32) -> (i32, i32) {
    %c0_i32 = arith.constant 0 : i32
    %c0_i32_0 = arith.constant 0 : i32
    %c0_i32_1 = arith.constant 0 : i32
    return %c0_i32, %c0_i32_0 : i32, i32
  }
  func.func @transform_7(%arg0: i32) -> (i32, i32) {
    %c0_i32 = arith.constant 0 : i32
    %c0_i32_0 = arith.constant 0 : i32
    %c0_i32_1 = arith.constant 0 : i32
    return %c0_i32, %c0_i32_0 : i32, i32
  }
  func.func @transform_8(%arg0: i32) -> (i32, i32) {
    %c0_i32 = arith.constant 0 : i32
    %c0_i32_0 = arith.constant 0 : i32
    %c0_i32_1 = arith.constant 0 : i32
    return %c0_i32, %c0_i32_0 : i32, i32
  }
  func.func @transform_9(%arg0: i32) -> (i32, i32) {
    %c0_i32 = arith.constant 0 : i32
    %c0_i32_0 = arith.constant 0 : i32
    %c0_i32_1 = arith.constant 0 : i32
    return %c0_i32, %c0_i32_0 : i32, i32
  }
  func.func @transform_10(%arg0: i32) -> (i32, i32) {
    %c0_i32 = arith.constant 0 : i32
    %c0_i32_0 = arith.constant 0 : i32
    %c0_i32_1 = arith.constant 0 : i32
    return %c0_i32, %c0_i32_0 : i32, i32
  }
  func.func @transform_11(%arg0: i32) -> (i32, i32) {
    %c0_i32 = arith.constant 0 : i32
    %c0_i32_0 = arith.constant 0 : i32
    %c0_i32_1 = arith.constant 0 : i32
    return %c0_i32, %c0_i32_0 : i32, i32
  }
  func.func @transform_12(%arg0: i32) -> (i32, i32) {
    %c0_i32 = arith.constant 0 : i32
    %c0_i32_0 = arith.constant 0 : i32
    %c0_i32_1 = arith.constant 0 : i32
    return %c0_i32, %c0_i32_0 : i32, i32
  }
  func.func @transform_13(%arg0: i32) -> (i32, i32) {
    %c0_i32 = arith.constant 0 : i32
    %c0_i32_0 = arith.constant 0 : i32
    %c0_i32_1 = arith.constant 0 : i32
    return %c0_i32, %c0_i32_0 : i32, i32
  }
  func.func @transform_14(%arg0: i32) -> (i32, i32) {
    %c0_i32 = arith.constant 0 : i32
    %c0_i32_0 = arith.constant 0 : i32
    %c0_i32_1 = arith.constant 0 : i32
    return %c0_i32, %c0_i32_0 : i32, i32
  }
  func.func @transform_15(%arg0: i32) -> (i32, i32) {
    %c0_i32 = arith.constant 0 : i32
    %c0_i32_0 = arith.constant 0 : i32
    %c0_i32_1 = arith.constant 0 : i32
    return %c0_i32, %c0_i32_0 : i32, i32
  }
  func.func @transform_16(%arg0: i32) -> (i32, i32) {
    %c0_i32 = arith.constant 0 : i32
    %c0_i32_0 = arith.constant 0 : i32
    %c0_i32_1 = arith.constant 0 : i32
    return %c0_i32, %c0_i32_0 : i32, i32
  }
  func.func @transform_17(%arg0: i32) -> (i32, i32) {
    %c0_i32 = arith.constant 0 : i32
    %c0_i32_0 = arith.constant 0 : i32
    %c0_i32_1 = arith.constant 0 : i32
    return %c0_i32, %c0_i32_0 : i32, i32
  }
  func.func @transform_18(%arg0: i32) -> (i32, i32) {
    %c0_i32 = arith.constant 0 : i32
    %c0_i32_0 = arith.constant 0 : i32
    %c0_i32_1 = arith.constant 0 : i32
    return %c0_i32, %c0_i32_0 : i32, i32
  }
  func.func @transform_19(%arg0: i32) -> (i32, i32) {
    %c0_i32 = arith.constant 0 : i32
    %c0_i32_0 = arith.constant 0 : i32
    %c0_i32_1 = arith.constant 0 : i32
    return %c0_i32, %c0_i32_0 : i32, i32
  }
  func.func @transform_20(%arg0: i32) -> (i32, i32) {
    %c0_i32 = arith.constant 0 : i32
    %c0_i32_0 = arith.constant 0 : i32
    %c0_i32_1 = arith.constant 0 : i32
    return %c0_i32, %c0_i32_0 : i32, i32
  }
  func.func @transform_21(%arg0: i32) -> (i32, i32, i32) {
    %c0_i32 = arith.constant 0 : i32
    %c0_i32_0 = arith.constant 0 : i32
    %c0_i32_1 = arith.constant 0 : i32
    return %arg0, %c0_i32, %c0_i32_0 : i32, i32, i32
  }
}

</mosaic_0001>

<llo_original>
// kernel: simsiam_forward.1
$region0: #{simsiam_forward.1}
  #allocation0 [shape = 'u32[]', space=smem, size = 0x4, offset = 0x4, fixed_abs, tag = 'smem constant byte address 0x4 - core index']
  #allocation1 [shape = 'u32[144,128]{1,0:T(1,128)}', space=vmem, size = 0x12000, scoped, tag = 'internal scratch']
  %s0 = inlined_call_operand.vmem [shape: f32[2,512,4], index: 0, kind: input, shape index: {}]
  %s1 = inlined_call_operand.vmem [shape: f32[4,32], index: 1, kind: input, shape index: {}]
  %s2 = inlined_call_operand.vmem [shape: f32[1,32], index: 2, kind: input, shape index: {}]
  %s3 = inlined_call_operand.vmem [shape: f32[32,64], index: 3, kind: input, shape index: {}]
  %s4 = inlined_call_operand.vmem [shape: f32[1,64], index: 4, kind: input, shape index: {}]
  %s5 = inlined_call_operand.vmem [shape: f32[1,64], index: 5, kind: input, shape index: {}]
  %s6 = inlined_call_operand.vmem [shape: f32[1,64], index: 6, kind: input, shape index: {}]
  %s7 = inlined_call_operand.vmem [shape: f32[64,64], index: 7, kind: input, shape index: {}]
  %s8 = inlined_call_operand.vmem [shape: f32[1,64], index: 8, kind: input, shape index: {}]
  %s9 = inlined_call_operand.vmem [shape: f32[1,64], index: 9, kind: input, shape index: {}]
  %s10 = inlined_call_operand.vmem [shape: f32[1,64], index: 10, kind: input, shape index: {}]
  %s11 = inlined_call_operand.vmem [shape: f32[64,64], index: 11, kind: input, shape index: {}]
  %s12 = inlined_call_operand.vmem [shape: f32[1,64], index: 12, kind: input, shape index: {}]
  %s13 = inlined_call_operand.vmem [shape: f32[1,64], index: 13, kind: input, shape index: {}]
  %s14 = inlined_call_operand.vmem [shape: f32[1,64], index: 14, kind: input, shape index: {}]
  %s15 = inlined_call_operand.vmem [shape: f32[64,32], index: 15, kind: input, shape index: {}]
  %s16 = inlined_call_operand.vmem [shape: f32[1,32], index: 16, kind: input, shape index: {}]
  %s17 = inlined_call_operand.vmem [shape: f32[1,32], index: 17, kind: input, shape index: {}]
  %s18 = inlined_call_operand.vmem [shape: f32[1,32], index: 18, kind: input, shape index: {}]
  %s19 = inlined_call_operand.vmem [shape: f32[32,64], index: 19, kind: input, shape index: {}]
  %s20 = inlined_call_operand.vmem [shape: f32[1,64], index: 20, kind: input, shape index: {}]
  %s21 = inlined_call_operand.vmem [shape: f32[2,2,128], index: 21, kind: output, shape index: {}]
  %s22 = sld [smem:[#allocation0]]
  $region117: #{simsiam_forward.1} parent=0
    _
  %s24 = ssub.s32 1, %s22
  %s25 = scalar_select 0, %s24, %s22
  loop: start=0, step=1, limit=4
  $region2: #{simsiam_forward.1} parent=0 // loop_pre_header
    _
  $region3: #{simsiam_forward.1} parent=0 // loop_header
    %s27 = sphi 0, %s31
    %p28 = scmp.ge.s32.totalorder %s27, 4
    %s37 = sphi 0, %s39
    %s40 = sphi 0, %s37
    %s41 = sphi 0, %s40
    %s57 = sphi 0, %s41
    %s61 = sphi 0, %s61
    %s63 = sphi 0, %s61
    %s64 = sphi 0, %s63
    %s78 = sphi 0, %s64
    %s82 = sphi 0, %s82
    %s84 = sphi 0, %s82
    %s85 = sphi 0, %s84
    %s99 = sphi 0, %s85
    %s103 = sphi 0, %s103
    %s105 = sphi 0, %s103
    %s106 = sphi 0, %s105
    %s120 = sphi 0, %s106
    %s124 = sphi 0, %s124
    %s126 = sphi 0, %s124
    %s127 = sphi 0, %s126
    %s141 = sphi 0, %s127
    %s145 = sphi 0, %s145
    %s147 = sphi 0, %s145
    %s148 = sphi 0, %s147
    %s162 = sphi 0, %s148
    %s166 = sphi 0, %s166
    %s168 = sphi 0, %s166
    %s169 = sphi 0, %s168
    %s183 = sphi 0, %s169
    %s187 = sphi 0, %s187
    %s189 = sphi 0, %s187
    %s190 = sphi 0, %s189
    %s204 = sphi 0, %s190
    %s208 = sphi 0, %s208
    %s210 = sphi 0, %s208
    %s211 = sphi 0, %s210
    %s225 = sphi 0, %s211
    %s229 = sphi 0, %s229
    %s231 = sphi 0, %s229
    %s232 = sphi 0, %s231
    %s246 = sphi 0, %s232
    %s250 = sphi 0, %s250
    %s252 = sphi 0, %s250
    %s253 = sphi 0, %s252
    %s267 = sphi 0, %s253
    %s271 = sphi 0, %s271
    %s273 = sphi 0, %s271
    %s274 = sphi 0, %s273
    %s288 = sphi 0, %s274
    %s292 = sphi 0, %s292
    %s294 = sphi 0, %s292
    %s295 = sphi 0, %s294
    %s309 = sphi 0, %s295
    %s313 = sphi 0, %s313
    %s315 = sphi 0, %s313
    %s316 = sphi 0, %s315
    %s330 = sphi 0, %s316
    %s334 = sphi 0, %s334
    %s336 = sphi 0, %s334
    %s337 = sphi 0, %s336
    %s351 = sphi 0, %s337
    %s355 = sphi 0, %s355
    %s357 = sphi 0, %s355
    %s358 = sphi 0, %s357
    %s372 = sphi 0, %s358
    %s376 = sphi 0, %s376
    %s378 = sphi 0, %s376
    %s379 = sphi 0, %s378
    %s393 = sphi 0, %s379
    %s397 = sphi 0, %s397
    %s399 = sphi 0, %s397
    %s400 = sphi 0, %s399
    %s414 = sphi 0, %s400
    %s418 = sphi 0, %s418
    %s420 = sphi 0, %s418
    %s421 = sphi 0, %s420
    %s435 = sphi 0, %s421
    %s439 = sphi 0, %s439
    %s441 = sphi 0, %s439
    %s442 = sphi 0, %s441
    %s456 = sphi 0, %s442
    %s460 = sphi 0, %s460
    %s462 = sphi 0, %s460
    %s463 = sphi 0, %s462
    %s477 = sphi 0, %s463
    %s483 = sphi 0, %s485
    %s486 = sphi 0, %s483
    %s487 = sphi 0, %s486
    %s503 = sphi 0, %s487
  $region4: #{simsiam_forward.1} parent=0 // loop_header_branch
    %30 = sbr.rel (%p28) target = $region8
  $region5: #{simsiam_forward.1} parent=0 // loop_body
    %s32 = ssub.s32 %s27, 1
    %s33 = ssub.s32 %s27, 2
    %s34 = sadd.s32 %s27, 1
    %s35 = ssub.s32 %s27, %s34
    %p36 = scmp.eq.s32.totalorder %s35, 0
    %s38 = sadd.s32 %s37, 1
    %s39 = scalar_select %p36, %s37, %s38
    %p42 = pneg %p36
    %p43 = scmp.eq.s32.totalorder %s27, 1
    %p44 = por %p42, %p43
    %p45 = scmp.ne.s32.totalorder %s37, %s40
    %p46 = scmp.eq.s32.totalorder %s27, 0
    %p47 = por %p45, %p46
    %p48 = scmp.ne.s32.totalorder %s37, %s40
    %p49 = scmp.eq.s32.totalorder %s32, 1
    %p50 = por %p48, %p49
    %p51 = scmp.ne.s32.totalorder %s40, %s41
    %p52 = scmp.eq.s32.totalorder %s32, 0
    %p53 = por %p51, %p52
    %p54 = scmp.ne.s32.totalorder %s40, %s41
    %p55 = scmp.eq.s32.totalorder %s33, 1
    %p56 = por %p54, %p55
    %p58 = scmp.ne.s32.totalorder %s41, %s57
    %p59 = scmp.eq.s32.totalorder %s33, 0
    %p60 = por %p58, %p59
    %s62 = sadd.s32 %s61, 1
    %p65 = scmp.eq.s32.totalorder %s27, 1
    %p66 = scmp.ne.s32.totalorder %s61, %s63
    %p67 = scmp.eq.s32.totalorder %s27, 0
    %p68 = por %p66, %p67
    %p69 = scmp.ne.s32.totalorder %s61, %s63
    %p70 = scmp.eq.s32.totalorder %s32, 1
    %p71 = por %p69, %p70
    %p72 = scmp.ne.s32.totalorder %s63, %s64
    %p73 = scmp.eq.s32.totalorder %s32, 0
    %p74 = por %p72, %p73
    %p75 = scmp.ne.s32.totalorder %s63, %s64
    %p76 = scmp.eq.s32.totalorder %s33, 1
    %p77 = por %p75, %p76
    %p79 = scmp.ne.s32.totalorder %s64, %s78
    %p80 = scmp.eq.s32.totalorder %s33, 0
    %p81 = por %p79, %p80
    %s83 = sadd.s32 %s82, 1
    %p86 = scmp.eq.s32.totalorder %s27, 1
    %p87 = scmp.ne.s32.totalorder %s82, %s84
    %p88 = scmp.eq.s32.totalorder %s27, 0
    %p89 = por %p87, %p88
    %p90 = scmp.ne.s32.totalorder %s82, %s84
    %p91 = scmp.eq.s32.totalorder %s32, 1
    %p92 = por %p90, %p91
    %p93 = scmp.ne.s32.totalorder %s84, %s85
    %p94 = scmp.eq.s32.totalorder %s32, 0
    %p95 = por %p93, %p94
    %p96 = scmp.ne.s32.totalorder %s84, %s85
    %p97 = scmp.eq.s32.totalorder %s33, 1
    %p98 = por %p96, %p97
    %p100 = scmp.ne.s32.totalorder %s85, %s99
    %p101 = scmp.eq.s32.totalorder %s33, 0
    %p102 = por %p100, %p101
    %s104 = sadd.s32 %s103, 1
    %p107 = scmp.eq.s32.totalorder %s27, 1
    %p108 = scmp.ne.s32.totalorder %s103, %s105
    %p109 = scmp.eq.s32.totalorder %s27, 0
    %p110 = por %p108, %p109
    %p111 = scmp.ne.s32.totalorder %s103, %s105
    %p112 = scmp.eq.s32.totalorder %s32, 1
    %p113 = por %p111, %p112
    %p114 = scmp.ne.s32.totalorder %s105, %s106
    %p115 = scmp.eq.s32.totalorder %s32, 0
    %p116 = por %p114, %p115
    %p117 = scmp.ne.s32.totalorder %s105, %s106
    %p118 = scmp.eq.s32.totalorder %s33, 1
    %p119 = por %p117, %p118
    %p121 = scmp.ne.s32.totalorder %s106, %s120
    %p122 = scmp.eq.s32.totalorder %s33, 0
    %p123 = por %p121, %p122
    %s125 = sadd.s32 %s124, 1
    %p128 = scmp.eq.s32.totalorder %s27, 1
    %p129 = scmp.ne.s32.totalorder %s124, %s126
    %p130 = scmp.eq.s32.totalorder %s27, 0
    %p131 = por %p129, %p130
    %p132 = scmp.ne.s32.totalorder %s124, %s126
    %p133 = scmp.eq.s32.totalorder %s32, 1
    %p134 = por %p132, %p133
    %p135 = scmp.ne.s32.totalorder %s126, %s127
    %p136 = scmp.eq.s32.totalorder %s32, 0
    %p137 = por %p135, %p136
    %p138 = scmp.ne.s32.totalorder %s126, %s127
    %p139 = scmp.eq.s32.totalorder %s33, 1
    %p140 = por %p138, %p139
    %p142 = scmp.ne.s32.totalorder %s127, %s141
    %p143 = scmp.eq.s32.totalorder %s33, 0
    %p144 = por %p142, %p143
    %s146 = sadd.s32 %s145, 1
    %p149 = scmp.eq.s32.totalorder %s27, 1
    %p150 = scmp.ne.s32.totalorder %s145, %s147
    %p151 = scmp.eq.s32.totalorder %s27, 0
    %p152 = por %p150, %p151
    %p153 = scmp.ne.s32.totalorder %s145, %s147
    %p154 = scmp.eq.s32.totalorder %s32, 1
    %p155 = por %p153, %p154
    %p156 = scmp.ne.s32.totalorder %s147, %s148
    %p157 = scmp.eq.s32.totalorder %s32, 0
    %p158 = por %p156, %p157
    %p159 = scmp.ne.s32.totalorder %s147, %s148
    %p160 = scmp.eq.s32.totalorder %s33, 1
    %p161 = por %p159, %p160
    %p163 = scmp.ne.s32.totalorder %s148, %s162
    %p164 = scmp.eq.s32.totalorder %s33, 0
    %p165 = por %p163, %p164
    %s167 = sadd.s32 %s166, 1
    %p170 = scmp.eq.s32.totalorder %s27, 1
    %p171 = scmp.ne.s32.totalorder %s166, %s168
    %p172 = scmp.eq.s32.totalorder %s27, 0
    %p173 = por %p171, %p172
    %p174 = scmp.ne.s32.totalorder %s166, %s168
    %p175 = scmp.eq.s32.totalorder %s32, 1
    %p176 = por %p174, %p175
    %p177 = scmp.ne.s32.totalorder %s168, %s169
    %p178 = scmp.eq.s32.totalorder %s32, 0
    %p179 = por %p177, %p178
    %p180 = scmp.ne.s32.totalorder %s168, %s169
    %p181 = scmp.eq.s32.totalorder %s33, 1
    %p182 = por %p180, %p181
    %p184 = scmp.ne.s32.totalorder %s169, %s183
    %p185 = scmp.eq.s32.totalorder %s33, 0
    %p186 = por %p184, %p185
    %s188 = sadd.s32 %s187, 1
    %p191 = scmp.eq.s32.totalorder %s27, 1
    %p192 = scmp.ne.s32.totalorder %s187, %s189
    %p193 = scmp.eq.s32.totalorder %s27, 0
    %p194 = por %p192, %p193
    %p195 = scmp.ne.s32.totalorder %s187, %s189
    %p196 = scmp.eq.s32.totalorder %s32, 1
    %p197 = por %p195, %p196
    %p198 = scmp.ne.s32.totalorder %s189, %s190
    %p199 = scmp.eq.s32.totalorder %s32, 0
    %p200 = por %p198, %p199
    %p201 = scmp.ne.s32.totalorder %s189, %s190
    %p202 = scmp.eq.s32.totalorder %s33, 1
    %p203 = por %p201, %p202
    %p205 = scmp.ne.s32.totalorder %s190, %s204
    %p206 = scmp.eq.s32.totalorder %s33, 0
    %p207 = por %p205, %p206
    %s209 = sadd.s32 %s208, 1
    %p212 = scmp.eq.s32.totalorder %s27, 1
    %p213 = scmp.ne.s32.totalorder %s208, %s210
    %p214 = scmp.eq.s32.totalorder %s27, 0
    %p215 = por %p213, %p214
    %p216 = scmp.ne.s32.totalorder %s208, %s210
    %p217 = scmp.eq.s32.totalorder %s32, 1
    %p218 = por %p216, %p217
    %p219 = scmp.ne.s32.totalorder %s210, %s211
    %p220 = scmp.eq.s32.totalorder %s32, 0
    %p221 = por %p219, %p220
    %p222 = scmp.ne.s32.totalorder %s210, %s211
    %p223 = scmp.eq.s32.totalorder %s33, 1
    %p224 = por %p222, %p223
    %p226 = scmp.ne.s32.totalorder %s211, %s225
    %p227 = scmp.eq.s32.totalorder %s33, 0
    %p228 = por %p226, %p227
    %s230 = sadd.s32 %s229, 1
    %p233 = scmp.eq.s32.totalorder %s27, 1
    %p234 = scmp.ne.s32.totalorder %s229, %s231
    %p235 = scmp.eq.s32.totalorder %s27, 0
    %p236 = por %p234, %p235
    %p237 = scmp.ne.s32.totalorder %s229, %s231
    %p238 = scmp.eq.s32.totalorder %s32, 1
    %p239 = por %p237, %p238
    %p240 = scmp.ne.s32.totalorder %s231, %s232
    %p241 = scmp.eq.s32.totalorder %s32, 0
    %p242 = por %p240, %p241
    %p243 = scmp.ne.s32.totalorder %s231, %s232
    %p244 = scmp.eq.s32.totalorder %s33, 1
    %p245 = por %p243, %p244
    %p247 = scmp.ne.s32.totalorder %s232, %s246
    %p248 = scmp.eq.s32.totalorder %s33, 0
    %p249 = por %p247, %p248
    %s251 = sadd.s32 %s250, 1
    %p254 = scmp.eq.s32.totalorder %s27, 1
    %p255 = scmp.ne.s32.totalorder %s250, %s252
    %p256 = scmp.eq.s32.totalorder %s27, 0
    %p257 = por %p255, %p256
    %p258 = scmp.ne.s32.totalorder %s250, %s252
    %p259 = scmp.eq.s32.totalorder %s32, 1
    %p260 = por %p258, %p259
    %p261 = scmp.ne.s32.totalorder %s252, %s253
    %p262 = scmp.eq.s32.totalorder %s32, 0
    %p263 = por %p261, %p262
    %p264 = scmp.ne.s32.totalorder %s252, %s253
    %p265 = scmp.eq.s32.totalorder %s33, 1
    %p266 = por %p264, %p265
    %p268 = scmp.ne.s32.totalorder %s253, %s267
    %p269 = scmp.eq.s32.totalorder %s33, 0
    %p270 = por %p268, %p269
    %s272 = sadd.s32 %s271, 1
    %p275 = scmp.eq.s32.totalorder %s27, 1
    %p276 = scmp.ne.s32.totalorder %s271, %s273
    %p277 = scmp.eq.s32.totalorder %s27, 0
    %p278 = por %p276, %p277
    %p279 = scmp.ne.s32.totalorder %s271, %s273
    %p280 = scmp.eq.s32.totalorder %s32, 1
    %p281 = por %p279, %p280
    %p282 = scmp.ne.s32.totalorder %s273, %s274
    %p283 = scmp.eq.s32.totalorder %s32, 0
    %p284 = por %p282, %p283
    %p285 = scmp.ne.s32.totalorder %s273, %s274
    %p286 = scmp.eq.s32.totalorder %s33, 1
    %p287 = por %p285, %p286
    %p289 = scmp.ne.s32.totalorder %s274, %s288
    %p290 = scmp.eq.s32.totalorder %s33, 0
    %p291 = por %p289, %p290
    %s293 = sadd.s32 %s292, 1
    %p296 = scmp.eq.s32.totalorder %s27, 1
    %p297 = scmp.ne.s32.totalorder %s292, %s294
    %p298 = scmp.eq.s32.totalorder %s27, 0
    %p299 = por %p297, %p298
    %p300 = scmp.ne.s32.totalorder %s292, %s294
    %p301 = scmp.eq.s32.totalorder %s32, 1
    %p302 = por %p300, %p301
    %p303 = scmp.ne.s32.totalorder %s294, %s295
    %p304 = scmp.eq.s32.totalorder %s32, 0
    %p305 = por %p303, %p304
    %p306 = scmp.ne.s32.totalorder %s294, %s295
    %p307 = scmp.eq.s32.totalorder %s33, 1
    %p308 = por %p306, %p307
    %p310 = scmp.ne.s32.totalorder %s295, %s309
    %p311 = scmp.eq.s32.totalorder %s33, 0
    %p312 = por %p310, %p311
    %s314 = sadd.s32 %s313, 1
    %p317 = scmp.eq.s32.totalorder %s27, 1
    %p318 = scmp.ne.s32.totalorder %s313, %s315
    %p319 = scmp.eq.s32.totalorder %s27, 0
    %p320 = por %p318, %p319
    %p321 = scmp.ne.s32.totalorder %s313, %s315
    %p322 = scmp.eq.s32.totalorder %s32, 1
    %p323 = por %p321, %p322
    %p324 = scmp.ne.s32.totalorder %s315, %s316
    %p325 = scmp.eq.s32.totalorder %s32, 0
    %p326 = por %p324, %p325
    %p327 = scmp.ne.s32.totalorder %s315, %s316
    %p328 = scmp.eq.s32.totalorder %s33, 1
    %p329 = por %p327, %p328
    %p331 = scmp.ne.s32.totalorder %s316, %s330
    %p332 = scmp.eq.s32.totalorder %s33, 0
    %p333 = por %p331, %p332
    %s335 = sadd.s32 %s334, 1
    %p338 = scmp.eq.s32.totalorder %s27, 1
    %p339 = scmp.ne.s32.totalorder %s334, %s336
    %p340 = scmp.eq.s32.totalorder %s27, 0
    %p341 = por %p339, %p340
    %p342 = scmp.ne.s32.totalorder %s334, %s336
    %p343 = scmp.eq.s32.totalorder %s32, 1
    %p344 = por %p342, %p343
    %p345 = scmp.ne.s32.totalorder %s336, %s337
    %p346 = scmp.eq.s32.totalorder %s32, 0
    %p347 = por %p345, %p346
    %p348 = scmp.ne.s32.totalorder %s336, %s337
    %p349 = scmp.eq.s32.totalorder %s33, 1
    %p350 = por %p348, %p349
    %p352 = scmp.ne.s32.totalorder %s337, %s351
    %p353 = scmp.eq.s32.totalorder %s33, 0
    %p354 = por %p352, %p353
    %s356 = sadd.s32 %s355, 1
    %p359 = scmp.eq.s32.totalorder %s27, 1
    %p360 = scmp.ne.s32.totalorder %s355, %s357
    %p361 = scmp.eq.s32.totalorder %s27, 0
    %p362 = por %p360, %p361
    %p363 = scmp.ne.s32.totalorder %s355, %s357
    %p364 = scmp.eq.s32.totalorder %s32, 1
    %p365 = por %p363, %p364
    %p366 = scmp.ne.s32.totalorder %s357, %s358
    %p367 = scmp.eq.s32.totalorder %s32, 0
    %p368 = por %p366, %p367
    %p369 = scmp.ne.s32.totalorder %s357, %s358
    %p370 = scmp.eq.s32.totalorder %s33, 1
    %p371 = por %p369, %p370
    %p373 = scmp.ne.s32.totalorder %s358, %s372
    %p374 = scmp.eq.s32.totalorder %s33, 0
    %p375 = por %p373, %p374
    %s377 = sadd.s32 %s376, 1
    %p380 = scmp.eq.s32.totalorder %s27, 1
    %p381 = scmp.ne.s32.totalorder %s376, %s378
    %p382 = scmp.eq.s32.totalorder %s27, 0
    %p383 = por %p381, %p382
    %p384 = scmp.ne.s32.totalorder %s376, %s378
    %p385 = scmp.eq.s32.totalorder %s32, 1
    %p386 = por %p384, %p385
    %p387 = scmp.ne.s32.totalorder %s378, %s379
    %p388 = scmp.eq.s32.totalorder %s32, 0
    %p389 = por %p387, %p388
    %p390 = scmp.ne.s32.totalorder %s378, %s379
    %p391 = scmp.eq.s32.totalorder %s33, 1
    %p392 = por %p390, %p391
    %p394 = scmp.ne.s32.totalorder %s379, %s393
    %p395 = scmp.eq.s32.totalorder %s33, 0
    %p396 = por %p394, %p395
    %s398 = sadd.s32 %s397, 1
    %p401 = scmp.eq.s32.totalorder %s27, 1
    %p402 = scmp.ne.s32.totalorder %s397, %s399
    %p403 = scmp.eq.s32.totalorder %s27, 0
    %p404 = por %p402, %p403
    %p405 = scmp.ne.s32.totalorder %s397, %s399
    %p406 = scmp.eq.s32.totalorder %s32, 1
    %p407 = por %p405, %p406
    %p408 = scmp.ne.s32.totalorder %s399, %s400
    %p409 = scmp.eq.s32.totalorder %s32, 0
    %p410 = por %p408, %p409
    %p411 = scmp.ne.s32.totalorder %s399, %s400
    %p412 = scmp.eq.s32.totalorder %s33, 1
    %p413 = por %p411, %p412
    %p415 = scmp.ne.s32.totalorder %s400, %s414
    %p416 = scmp.eq.s32.totalorder %s33, 0
    %p417 = por %p415, %p416
    %s419 = sadd.s32 %s418, 1
    %p422 = scmp.eq.s32.totalorder %s27, 1
    %p423 = scmp.ne.s32.totalorder %s418, %s420
    %p424 = scmp.eq.s32.totalorder %s27, 0
    %p425 = por %p423, %p424
    %p426 = scmp.ne.s32.totalorder %s418, %s420
    %p427 = scmp.eq.s32.totalorder %s32, 1
    %p428 = por %p426, %p427
    %p429 = scmp.ne.s32.totalorder %s420, %s421
    %p430 = scmp.eq.s32.totalorder %s32, 0
    %p431 = por %p429, %p430
    %p432 = scmp.ne.s32.totalorder %s420, %s421
    %p433 = scmp.eq.s32.totalorder %s33, 1
    %p434 = por %p432, %p433
    %p436 = scmp.ne.s32.totalorder %s421, %s435
    %p437 = scmp.eq.s32.totalorder %s33, 0
    %p438 = por %p436, %p437
    %s440 = sadd.s32 %s439, 1
    %p443 = scmp.eq.s32.totalorder %s27, 1
    %p444 = scmp.ne.s32.totalorder %s439, %s441
    %p445 = scmp.eq.s32.totalorder %s27, 0
    %p446 = por %p444, %p445
    %p447 = scmp.ne.s32.totalorder %s439, %s441
    %p448 = scmp.eq.s32.totalorder %s32, 1
    %p449 = por %p447, %p448
    %p450 = scmp.ne.s32.totalorder %s441, %s442
    %p451 = scmp.eq.s32.totalorder %s32, 0
    %p452 = por %p450, %p451
    %p453 = scmp.ne.s32.totalorder %s441, %s442
    %p454 = scmp.eq.s32.totalorder %s33, 1
    %p455 = por %p453, %p454
    %p457 = scmp.ne.s32.totalorder %s442, %s456
    %p458 = scmp.eq.s32.totalorder %s33, 0
    %p459 = por %p457, %p458
    %s461 = sadd.s32 %s460, 1
    %p464 = scmp.eq.s32.totalorder %s27, 1
    %p465 = scmp.ne.s32.totalorder %s460, %s462
    %p466 = scmp.eq.s32.totalorder %s27, 0
    %p467 = por %p465, %p466
    %p468 = scmp.ne.s32.totalorder %s460, %s462
    %p469 = scmp.eq.s32.totalorder %s32, 1
    %p470 = por %p468, %p469
    %p471 = scmp.ne.s32.totalorder %s462, %s463
    %p472 = scmp.eq.s32.totalorder %s32, 0
    %p473 = por %p471, %p472
    %p474 = scmp.ne.s32.totalorder %s462, %s463
    %p475 = scmp.eq.s32.totalorder %s33, 1
    %p476 = por %p474, %p475
    %p478 = scmp.ne.s32.totalorder %s463, %s477
    %p479 = scmp.eq.s32.totalorder %s33, 0
    %p480 = por %p478, %p479
    %s481 = ssub.s32 %s27, %s34
    %p482 = scmp.eq.s32.totalorder %s481, 0
    %s484 = sadd.s32 %s483, 1
    %s485 = scalar_select %p482, %s483, %s484
    %p488 = pneg %p482
    %p489 = scmp.eq.s32.totalorder %s27, 1
    %p490 = por %p488, %p489
    %p491 = scmp.ne.s32.totalorder %s483, %s486
    %p492 = scmp.eq.s32.totalorder %s27, 0
    %p493 = por %p491, %p492
    %p494 = scmp.ne.s32.totalorder %s483, %s486
    %p495 = scmp.eq.s32.totalorder %s32, 1
    %p496 = por %p494, %p495
    %p497 = scmp.ne.s32.totalorder %s486, %s487
    %p498 = scmp.eq.s32.totalorder %s32, 0
    %p499 = por %p497, %p498
    %p500 = scmp.ne.s32.totalorder %s486, %s487
    %p501 = scmp.eq.s32.totalorder %s33, 1
    %p502 = por %p500, %p501
    %p504 = scmp.ne.s32.totalorder %s487, %s503
    %p505 = scmp.eq.s32.totalorder %s33, 0
    %p506 = por %p504, %p505
    %p507 = scmp.le.s32.totalorder 1, %s27
    %p508 = scmp.lt.s32.totalorder %s27, 3
    %p509 = pnand %p507, %p508
    %p510 = pneg %p509
    // Predicated region
    $region9: #{simsiam_forward.1} parent=5 // pred_check
      _
    $region10: #{simsiam_forward.1} parent=5 // pred_check_branch
      %512 = sbr.rel (%p509) target = $region12
    $region11: #{simsiam_forward.1} parent=5 // pred_region
      %s513 = ssub.s32 %s27, 1
      // Predicated region
      $region13: #{simsiam_forward.1} parent=11 // pred_check
        %p514 = pneg %p74
      $region14: #{simsiam_forward.1} parent=11 // pred_check_branch
        %516 = sbr.rel (%p514) target = $region16
      $region15: #{simsiam_forward.1} parent=11 // pred_region
        _
      $region16: #{simsiam_forward.1} parent=11 // pred_fallthru
        _
      // Predicated region
      $region17: #{simsiam_forward.1} parent=11 // pred_check
        %p517 = pneg %p95
      $region18: #{simsiam_forward.1} parent=11 // pred_check_branch
        %519 = sbr.rel (%p517) target = $region20
      $region19: #{simsiam_forward.1} parent=11 // pred_region
        _
      $region20: #{simsiam_forward.1} parent=11 // pred_fallthru
        _
      // Predicated region
      $region21: #{simsiam_forward.1} parent=11 // pred_check
        %p520 = pneg %p116
      $region22: #{simsiam_forward.1} parent=11 // pred_check_branch
        %522 = sbr.rel (%p520) target = $region24
      $region23: #{simsiam_forward.1} parent=11 // pred_region
        _
      $region24: #{simsiam_forward.1} parent=11 // pred_fallthru
        _
      // Predicated region
      $region25: #{simsiam_forward.1} parent=11 // pred_check
        %p523 = pneg %p137
      $region26: #{simsiam_forward.1} parent=11 // pred_check_branch
        %525 = sbr.rel (%p523) target = $region28
      $region27: #{simsiam_forward.1} parent=11 // pred_region
        _
      $region28: #{simsiam_forward.1} parent=11 // pred_fallthru
        _
      // Predicated region
      $region29: #{simsiam_forward.1} parent=11 // pred_check
        %p526 = pneg %p158
      $region30: #{simsiam_forward.1} parent=11 // pred_check_branch
        %528 = sbr.rel (%p526) target = $region32
      $region31: #{simsiam_forward.1} parent=11 // pred_region
        _
      $region32: #{simsiam_forward.1} parent=11 // pred_fallthru
        _
      // Predicated region
      $region33: #{simsiam_forward.1} parent=11 // pred_check
        %p529 = pneg %p179
      $region34: #{simsiam_forward.1} parent=11 // pred_check_branch
        %531 = sbr.rel (%p529) target = $region36
      $region35: #{simsiam_forward.1} parent=11 // pred_region
        _
      $region36: #{simsiam_forward.1} parent=11 // pred_fallthru
        _
      // Predicated region
      $region37: #{simsiam_forward.1} parent=11 // pred_check
        %p532 = pneg %p200
      $region38: #{simsiam_forward.1} parent=11 // pred_check_branch
        %534 = sbr.rel (%p532) target = $region40
      $region39: #{simsiam_forward.1} parent=11 // pred_region
        _
      $region40: #{simsiam_forward.1} parent=11 // pred_fallthru
        _
      // Predicated region
      $region41: #{simsiam_forward.1} parent=11 // pred_check
        %p535 = pneg %p221
      $region42: #{simsiam_forward.1} parent=11 // pred_check_branch
        %537 = sbr.rel (%p535) target = $region44
      $region43: #{simsiam_forward.1} parent=11 // pred_region
        _
      $region44: #{simsiam_forward.1} parent=11 // pred_fallthru
        _
      // Predicated region
      $region45: #{simsiam_forward.1} parent=11 // pred_check
        %p538 = pneg %p242
      $region46: #{simsiam_forward.1} parent=11 // pred_check_branch
        %540 = sbr.rel (%p538) target = $region48
      $region47: #{simsiam_forward.1} parent=11 // pred_region
        _
      $region48: #{simsiam_forward.1} parent=11 // pred_fallthru
        _
      // Predicated region
      $region49: #{simsiam_forward.1} parent=11 // pred_check
        %p541 = pneg %p263
      $region50: #{simsiam_forward.1} parent=11 // pred_check_branch
        %543 = sbr.rel (%p541) target = $region52
      $region51: #{simsiam_forward.1} parent=11 // pred_region
        _
      $region52: #{simsiam_forward.1} parent=11 // pred_fallthru
        _
      // Predicated region
      $region53: #{simsiam_forward.1} parent=11 // pred_check
        %p544 = pneg %p284
      $region54: #{simsiam_forward.1} parent=11 // pred_check_branch
        %546 = sbr.rel (%p544) target = $region56
      $region55: #{simsiam_forward.1} parent=11 // pred_region
        _
      $region56: #{simsiam_forward.1} parent=11 // pred_fallthru
        _
      // Predicated region
      $region57: #{simsiam_forward.1} parent=11 // pred_check
        %p547 = pneg %p305
      $region58: #{simsiam_forward.1} parent=11 // pred_check_branch
        %549 = sbr.rel (%p547) target = $region60
      $region59: #{simsiam_forward.1} parent=11 // pred_region
        _
      $region60: #{simsiam_forward.1} parent=11 // pred_fallthru
        _
      // Predicated region
      $region61: #{simsiam_forward.1} parent=11 // pred_check
        %p550 = pneg %p326
      $region62: #{simsiam_forward.1} parent=11 // pred_check_branch
        %552 = sbr.rel (%p550) target = $region64
      $region63: #{simsiam_forward.1} parent=11 // pred_region
        _
      $region64: #{simsiam_forward.1} parent=11 // pred_fallthru
        _
      // Predicated region
      $region65: #{simsiam_forward.1} parent=11 // pred_check
        %p553 = pneg %p347
      $region66: #{simsiam_forward.1} parent=11 // pred_check_branch
        %555 = sbr.rel (%p553) target = $region68
      $region67: #{simsiam_forward.1} parent=11 // pred_region
        _
      $region68: #{simsiam_forward.1} parent=11 // pred_fallthru
        _
      // Predicated region
      $region69: #{simsiam_forward.1} parent=11 // pred_check
        %p556 = pneg %p368
      $region70: #{simsiam_forward.1} parent=11 // pred_check_branch
        %558 = sbr.rel (%p556) target = $region72
      $region71: #{simsiam_forward.1} parent=11 // pred_region
        _
      $region72: #{simsiam_forward.1} parent=11 // pred_fallthru
        _
      // Predicated region
      $region73: #{simsiam_forward.1} parent=11 // pred_check
        %p559 = pneg %p389
      $region74: #{simsiam_forward.1} parent=11 // pred_check_branch
        %561 = sbr.rel (%p559) target = $region76
      $region75: #{simsiam_forward.1} parent=11 // pred_region
        _
      $region76: #{simsiam_forward.1} parent=11 // pred_fallthru
        _
      // Predicated region
      $region77: #{simsiam_forward.1} parent=11 // pred_check
        %p562 = pneg %p410
      $region78: #{simsiam_forward.1} parent=11 // pred_check_branch
        %564 = sbr.rel (%p562) target = $region80
      $region79: #{simsiam_forward.1} parent=11 // pred_region
        _
      $region80: #{simsiam_forward.1} parent=11 // pred_fallthru
        _
      // Predicated region
      $region81: #{simsiam_forward.1} parent=11 // pred_check
        %p565 = pneg %p431
      $region82: #{simsiam_forward.1} parent=11 // pred_check_branch
        %567 = sbr.rel (%p565) target = $region84
      $region83: #{simsiam_forward.1} parent=11 // pred_region
        _
      $region84: #{simsiam_forward.1} parent=11 // pred_fallthru
        _
      // Predicated region
      $region85: #{simsiam_forward.1} parent=11 // pred_check
        %p568 = pneg %p452
      $region86: #{simsiam_forward.1} parent=11 // pred_check_branch
        %570 = sbr.rel (%p568) target = $region88
      $region87: #{simsiam_forward.1} parent=11 // pred_region
        _
      $region88: #{simsiam_forward.1} parent=11 // pred_fallthru
        _
      // Predicated region
      $region89: #{simsiam_forward.1} parent=11 // pred_check
        %p571 = pneg %p473
      $region90: #{simsiam_forward.1} parent=11 // pred_check_branch
        %573 = sbr.rel (%p571) target = $region92
      $region91: #{simsiam_forward.1} parent=11 // pred_region
        _
      $region92: #{simsiam_forward.1} parent=11 // pred_fallthru
        _
    $region12: #{simsiam_forward.1} parent=5 // pred_fallthru
      _
    %p574 = scmp.lt.s32.totalorder %s27, 2
    // Predicated region
    $region93: #{simsiam_forward.1} parent=5 // pred_check
      %p575 = pneg %p574
    $region94: #{simsiam_forward.1} parent=5 // pred_check_branch
      %577 = sbr.rel (%p575) target = $region96
    $region95: #{simsiam_forward.1} parent=5 // pred_region
      // Predicated region
      $region97: #{simsiam_forward.1} parent=95 // pred_check
        %p578 = pneg %p47
      $region98: #{simsiam_forward.1} parent=95 // pred_check_branch
        %580 = sbr.rel (%p578) target = $region100
      $region99: #{simsiam_forward.1} parent=95 // pred_region
        %p581 = scmp.lt.s32.totalorder %s27, 1
        %s582 = scalar_select %p581, %s27, 1
        %s583 = smul.addr %s582, 64
        %s584 = smul.addr %s583, 8
        %s585 = scalar_lea.vmem %s0, %s584
      $region100: #{simsiam_forward.1} parent=95 // pred_fallthru
        _
    $region96: #{simsiam_forward.1} parent=5 // pred_fallthru
      _
    %p586 = scmp.le.s32.totalorder 1, %s27
    %p587 = scmp.lt.s32.totalorder %s27, 3
    %p588 = pnand %p586, %p587
    %p589 = pneg %p588
    // Predicated region
    $region101: #{simsiam_forward.1} parent=5 // pred_check
      _
    $region102: #{simsiam_forward.1} parent=5 // pred_check_branch
      %591 = sbr.rel (%p588) target = $region104
    $region103: #{simsiam_forward.1} parent=5 // pred_region
      %s592 = ssub.s32 %s27, 1
      %p593 = scmp.lt.s32.totalorder %s32, 1
      %s594 = scalar_select %p593, %s32, 1
      %s595 = smul.addr %s594, 64
      %s596 = smul.addr %s595, 8
      %s597 = scalar_lea.vmem %s0, %s596
      %p598 = pneg %p53
      %p599 = pneg %p50
      %p600 = pneg %p74
      %p601 = pneg %p71
      %p602 = pneg %p95
      %p603 = pneg %p92
      %p604 = pneg %p116
      %p605 = pneg %p113
      %p606 = pneg %p137
      %p607 = pneg %p134
      %p608 = pneg %p158
      %p609 = pneg %p155
      %p610 = pneg %p179
      %p611 = pneg %p176
      %p612 = pneg %p200
      %p613 = pneg %p197
      %p614 = pneg %p221
      %p615 = pneg %p218
      %p616 = pneg %p242
      %p617 = pneg %p239
      %p618 = pneg %p263
      %p619 = pneg %p260
      %p620 = pneg %p284
      %p621 = pneg %p281
      %p622 = pneg %p305
      %p623 = pneg %p302
      %p624 = pneg %p326
      %p625 = pneg %p323
      %p626 = pneg %p347
      %p627 = pneg %p344
      %p628 = pneg %p368
      %p629 = pneg %p365
      %p630 = pneg %p389
      %p631 = pneg %p386
      %p632 = pneg %p410
      %p633 = pneg %p407
      %p634 = pneg %p431
      %p635 = pneg %p428
      %p636 = pneg %p452
      %p637 = pneg %p449
      %p638 = pneg %p473
      %p639 = pneg %p470
      %p640 = pneg %p499
      %p641 = pneg %p496
      %p642 = scmp.lt.s32.totalorder %s32, 1
      %s643 = scalar_select %p642, %s32, 1
      %s644 = smul.addr %s643, 2
      %s645 = scalar_lea.vmem %s21, %s644
      %p646 = scmp.lt.s32.totalorder %s32, 1
      %s647 = scalar_select %p646, %s32, 1
      %s648 = smul.addr %s647, 64
      %s649 = smul.addr %s648, 8
      %s650 = scalar_lea.vmem %s0, %s649
      %p651 = scmp.lt.s32.totalorder %s32, 1
      %s652 = scalar_select %p651, %s32, 1
      %s653 = smul.addr %s652, 2
      %s654 = scalar_lea.vmem %s21, %s653
      %v655 = vld [vmem:[%s650] sm:$0xff]
      %v656 = vld [vmem:[%s650 + $0x8] sm:$0xff]
      %v657 = vld [vmem:[%s650 + $0x10] sm:$0xff]
      %v658 = vld [vmem:[%s650 + $0x18] sm:$0xff]
      %v659 = vld [vmem:[%s650 + $0x20] sm:$0xff]
      %v660 = vld [vmem:[%s650 + $0x28] sm:$0xff]
      %v661 = vld [vmem:[%s650 + $0x30] sm:$0xff]
      %v662 = vld [vmem:[%s650 + $0x38] sm:$0xff]
      %v663 = vld [vmem:[%s650 + $0x40] sm:$0xff]
      %v664 = vld [vmem:[%s650 + $0x48] sm:$0xff]
      %v665 = vld [vmem:[%s650 + $0x50] sm:$0xff]
      %v666 = vld [vmem:[%s650 + $0x58] sm:$0xff]
      %v667 = vld [vmem:[%s650 + $0x60] sm:$0xff]
      %v668 = vld [vmem:[%s650 + $0x68] sm:$0xff]
      %v669 = vld [vmem:[%s650 + $0x70] sm:$0xff]
      %v670 = vld [vmem:[%s650 + $0x78] sm:$0xff]
      %v671 = vld [vmem:[%s650 + $0x80] sm:$0xff]
      %v672 = vld [vmem:[%s650 + $0x88] sm:$0xff]
      %v673 = vld [vmem:[%s650 + $0x90] sm:$0xff]
      %v674 = vld [vmem:[%s650 + $0x98] sm:$0xff]
      %v675 = vld [vmem:[%s650 + $0xa0] sm:$0xff]
      %v676 = vld [vmem:[%s650 + $0xa8] sm:$0xff]
      %v677 = vld [vmem:[%s650 + $0xb0] sm:$0xff]
      %v678 = vld [vmem:[%s650 + $0xb8] sm:$0xff]
      %v679 = vld [vmem:[%s650 + $0xc0] sm:$0xff]
      %v680 = vld [vmem:[%s650 + $0xc8] sm:$0xff]
      %v681 = vld [vmem:[%s650 + $0xd0] sm:$0xff]
      %v682 = vld [vmem:[%s650 + $0xd8] sm:$0xff]
      %v683 = vld [vmem:[%s650 + $0xe0] sm:$0xff]
      %v684 = vld [vmem:[%s650 + $0xe8] sm:$0xff]
      %v685 = vld [vmem:[%s650 + $0xf0] sm:$0xff]
      %v686 = vld [vmem:[%s650 + $0xf8] sm:$0xff]
      %v687 = vld [vmem:[%s650 + $0x100] sm:$0xff]
      %v688 = vld [vmem:[%s650 + $0x108] sm:$0xff]
      %v689 = vld [vmem:[%s650 + $0x110] sm:$0xff]
      %v690 = vld [vmem:[%s650 + $0x118] sm:$0xff]
      %v691 = vld [vmem:[%s650 + $0x120] sm:$0xff]
      %v692 = vld [vmem:[%s650 + $0x128] sm:$0xff]
      %v693 = vld [vmem:[%s650 + $0x130] sm:$0xff]
      %v694 = vld [vmem:[%s650 + $0x138] sm:$0xff]
      %v695 = vld [vmem:[%s650 + $0x140] sm:$0xff]
      %v696 = vld [vmem:[%s650 + $0x148] sm:$0xff]
      %v697 = vld [vmem:[%s650 + $0x150] sm:$0xff]
      %v698 = vld [vmem:[%s650 + $0x158] sm:$0xff]
      %v699 = vld [vmem:[%s650 + $0x160] sm:$0xff]
      %v700 = vld [vmem:[%s650 + $0x168] sm:$0xff]
      %v701 = vld [vmem:[%s650 + $0x170] sm:$0xff]
      %v702 = vld [vmem:[%s650 + $0x178] sm:$0xff]
      %v703 = vld [vmem:[%s650 + $0x180] sm:$0xff]
      %v704 = vld [vmem:[%s650 + $0x188] sm:$0xff]
      %v705 = vld [vmem:[%s650 + $0x190] sm:$0xff]
      %v706 = vld [vmem:[%s650 + $0x198] sm:$0xff]
      %v707 = vld [vmem:[%s650 + $0x1a0] sm:$0xff]
      %v708 = vld [vmem:[%s650 + $0x1a8] sm:$0xff]
      %v709 = vld [vmem:[%s650 + $0x1b0] sm:$0xff]
      %v710 = vld [vmem:[%s650 + $0x1b8] sm:$0xff]
      %v711 = vld [vmem:[%s650 + $0x1c0] sm:$0xff]
      %v712 = vld [vmem:[%s650 + $0x1c8] sm:$0xff]
      %v713 = vld [vmem:[%s650 + $0x1d0] sm:$0xff]
      %v714 = vld [vmem:[%s650 + $0x1d8] sm:$0xff]
      %v715 = vld [vmem:[%s650 + $0x1e0] sm:$0xff]
      %v716 = vld [vmem:[%s650 + $0x1e8] sm:$0xff]
      %v717 = vld [vmem:[%s650 + $0x1f0] sm:$0xff]
      %v718 = vld [vmem:[%s650 + $0x1f8] sm:$0xff]
      %v719 = vld [vmem:[%s1] sm:$0xf]
      %v720 = vld [vmem:[%s2] sm:$0x1]
      %v722 = vlaneseq
      %v723 = vshrl.u32 %v722, 7
      %v724 = vsub.s32 0, %v723
      %v725 = vrot.slane %v720, %v724
      %vm727 = vcmask 31744
      %v729 = vsel %vm727, %v655, 0
      %v732 = vsel %vm727, %v656, 0
      %v735 = vsel %vm727, %v657, 0
      %v738 = vsel %vm727, %v658, 0
      %v741 = vsel %vm727, %v659, 0
      %v744 = vsel %vm727, %v660, 0
      %v747 = vsel %vm727, %v661, 0
      %v750 = vsel %vm727, %v662, 0
      %v753 = vsel %vm727, %v663, 0
      %v756 = vsel %vm727, %v664, 0
      %v759 = vsel %vm727, %v665, 0
      %v762 = vsel %vm727, %v666, 0
      %v765 = vsel %vm727, %v667, 0
      %v768 = vsel %vm727, %v668, 0
      %v771 = vsel %vm727, %v669, 0
      %v774 = vsel %vm727, %v670, 0
      %v777 = vsel %vm727, %v671, 0
      %v780 = vsel %vm727, %v672, 0
      %v783 = vsel %vm727, %v673, 0
      %v786 = vsel %vm727, %v674, 0
      %v789 = vsel %vm727, %v675, 0
      %v792 = vsel %vm727, %v676, 0
      %v795 = vsel %vm727, %v677, 0
      %v798 = vsel %vm727, %v678, 0
      %v801 = vsel %vm727, %v679, 0
      %v804 = vsel %vm727, %v680, 0
      %v807 = vsel %vm727, %v681, 0
      %v810 = vsel %vm727, %v682, 0
      %v813 = vsel %vm727, %v683, 0
      %v816 = vsel %vm727, %v684, 0
      %v819 = vsel %vm727, %v685, 0
      %v822 = vsel %vm727, %v686, 0
      %v825 = vsel %vm727, %v687, 0
      %v828 = vsel %vm727, %v688, 0
      %v831 = vsel %vm727, %v689, 0
      %v834 = vsel %vm727, %v690, 0
      %v837 = vsel %vm727, %v691, 0
      %v840 = vsel %vm727, %v692, 0
      %v843 = vsel %vm727, %v693, 0
      %v846 = vsel %vm727, %v694, 0
      %v849 = vsel %vm727, %v695, 0
      %v852 = vsel %vm727, %v696, 0
      %v855 = vsel %vm727, %v697, 0
      %v858 = vsel %vm727, %v698, 0
      %v861 = vsel %vm727, %v699, 0
      %v864 = vsel %vm727, %v700, 0
      %v867 = vsel %vm727, %v701, 0
      %v870 = vsel %vm727, %v702, 0
      %v873 = vsel %vm727, %v703, 0
      %v876 = vsel %vm727, %v704, 0
      %v879 = vsel %vm727, %v705, 0
      %v882 = vsel %vm727, %v706, 0
      %v885 = vsel %vm727, %v707, 0
      %v888 = vsel %vm727, %v708, 0
      %v891 = vsel %vm727, %v709, 0
      %v894 = vsel %vm727, %v710, 0
      %v897 = vsel %vm727, %v711, 0
      %v900 = vsel %vm727, %v712, 0
      %v903 = vsel %vm727, %v713, 0
      %v906 = vsel %vm727, %v714, 0
      %v909 = vsel %vm727, %v715, 0
      %v912 = vsel %vm727, %v716, 0
      %v915 = vsel %vm727, %v717, 0
      %v918 = vsel %vm727, %v718, 0
      %vm920 = vcmask 1043456
      %v922 = vsel %vm920, %v719, 0
      %924 = vmatprep.subr.mxu0 0.0
      %925 = vmatpush1.msra.mxu0 0.0
      %926 = vmatprep.subr.mxu0 0.0
      %927 = vmatpush1.msra.mxu0 0.0
      %928 = vmatprep.subr.mxu0 0.0
      %929 = vmatpush1.msra.mxu0 0.0
      %930 = vmatprep.subr.mxu0 0.0
      %931 = vmatpush1.msra.mxu0 0.0
      %932 = vmatprep.subr.mxu0 0.0
      %933 = vmatpush1.msra.mxu0 0.0
      %934 = vmatprep.subr.mxu0 0.0
      %935 = vmatpush1.msra.mxu0 0.0
      %936 = vmatprep.subr.mxu0 0.0
      %937 = vmatpush1.msra.mxu0 0.0
      %938 = vmatprep.subr.mxu0 0.0
      %939 = vmatpush1.msra.mxu0 0.0
      %940 = vmatprep.subr.mxu0 0.0
      %941 = vmatpush1.msra.mxu0 0.0
      %942 = vmatprep.subr.mxu0 0.0
      %943 = vmatpush1.msra.mxu0 0.0
      %944 = vmatprep.subr.mxu0 0.0
      %945 = vmatpush1.msra.mxu0 0.0
      %946 = vmatprep.subr.mxu0 0.0
      %947 = vmatpush1.msra.mxu0 0.0
      %948 = vmatprep.subr.mxu0 0.0
      %949 = vmatpush1.msra.mxu0 0.0
      %950 = vmatprep.subr.mxu0 0.0
      %951 = vmatpush1.msra.mxu0 0.0
      %952 = vmatprep.subr.mxu0 0.0
      %953 = vmatpush1.msra.mxu0 0.0
      %954 = vmatprep.subr.mxu0 0.0
      %955 = vmatpush1.msra.mxu0 %v922
      %956 = vmatprep.subr.mxu0 0.0
      %957 = vmatpush2.msra.mxu0 0.0
      %958 = vmatprep.subr.mxu0 0.0
      %959 = vmatpush2.msra.mxu0 0.0
      %960 = vmatprep.subr.mxu0 0.0
      %961 = vmatpush2.msra.mxu0 0.0
      %962 = vmatprep.subr.mxu0 0.0
      %963 = vmatpush2.msra.mxu0 0.0
      %964 = vmatprep.subr.mxu0 0.0
      %965 = vmatpush2.msra.mxu0 0.0
      %966 = vmatprep.subr.mxu0 0.0
      %967 = vmatpush2.msra.mxu0 0.0
      %968 = vmatprep.subr.mxu0 0.0
      %969 = vmatpush2.msra.mxu0 0.0
      %970 = vmatprep.subr.mxu0 0.0
      %971 = vmatpush2.msra.mxu0 0.0
      %972 = vmatprep.subr.mxu0 0.0
      %973 = vmatpush2.msra.mxu0 0.0
      %974 = vmatprep.subr.mxu0 0.0
      %975 = vmatpush2.msra.mxu0 0.0
      %976 = vmatprep.subr.mxu0 0.0
      %977 = vmatpush2.msra.mxu0 0.0
      %978 = vmatprep.subr.mxu0 0.0
      %979 = vmatpush2.msra.mxu0 0.0
      %980 = vmatprep.subr.mxu0 0.0
      %981 = vmatpush2.msra.mxu0 0.0
      %982 = vmatprep.subr.mxu0 0.0
      %983 = vmatpush2.msra.mxu0 0.0
      %984 = vmatprep.subr.mxu0 0.0
      %985 = vmatpush2.msra.mxu0 0.0
      %986 = vmatprep.subr.mxu0 0.0
      %987 = vmatpush2.msra.mxu0 0.0
      %988 = vmatprep.mubr.f32.mxu0 0.0
      %989 = vmatmul.mubr.f32.gmra.mxu0 %v729
      %v990 = vpop.f32.mrf.mxu0
      %v991 = vadd.f32 %v725, %v990
      %v992 = vpop.f32.mrf.mxu0
      %993 = vmatprep.mubr.f32.mxu0 0.0
      %994 = vmatmul.mubr.f32.gmra.mxu0 %v732
      %v995 = vpop.f32.mrf.mxu0
      %v996 = vadd.f32 %v725, %v995
      %v997 = vpop.f32.mrf.mxu0
      %998 = vmatprep.mubr.f32.mxu0 0.0
      %999 = vmatmul.mubr.f32.gmra.mxu0 %v735
      %v1000 = vpop.f32.mrf.mxu0
      %v1001 = vadd.f32 %v725, %v1000
      %v1002 = vpop.f32.mrf.mxu0
      %1003 = vmatprep.mubr.f32.mxu0 0.0
      %1004 = vmatmul.mubr.f32.gmra.mxu0 %v738
      %v1005 = vpop.f32.mrf.mxu0
      %v1006 = vadd.f32 %v725, %v1005
      %v1007 = vpop.f32.mrf.mxu0
      %1008 = vmatprep.mubr.f32.mxu0 0.0
      %1009 = vmatmul.mubr.f32.gmra.mxu0 %v741
      %v1010 = vpop.f32.mrf.mxu0
      %v1011 = vadd.f32 %v725, %v1010
      %v1012 = vpop.f32.mrf.mxu0
      %1013 = vmatprep.mubr.f32.mxu0 0.0
      %1014 = vmatmul.mubr.f32.gmra.mxu0 %v744
      %v1015 = vpop.f32.mrf.mxu0
      %v1016 = vadd.f32 %v725, %v1015
      %v1017 = vpop.f32.mrf.mxu0
      %1018 = vmatprep.mubr.f32.mxu0 0.0
      %1019 = vmatmul.mubr.f32.gmra.mxu0 %v747
      %v1020 = vpop.f32.mrf.mxu0
      %v1021 = vadd.f32 %v725, %v1020
      %v1022 = vpop.f32.mrf.mxu0
      %1023 = vmatprep.mubr.f32.mxu0 0.0
      %1024 = vmatmul.mubr.f32.gmra.mxu0 %v750
      %v1025 = vpop.f32.mrf.mxu0
      %v1026 = vadd.f32 %v725, %v1025
      %v1027 = vpop.f32.mrf.mxu0
      %1028 = vmatprep.mubr.f32.mxu0 0.0
      %1029 = vmatmul.mubr.f32.gmra.mxu0 %v753
      %v1030 = vpop.f32.mrf.mxu0
      %v1031 = vadd.f32 %v725, %v1030
      %v1032 = vpop.f32.mrf.mxu0
      %1033 = vmatprep.mubr.f32.mxu0 0.0
      %1034 = vmatmul.mubr.f32.gmra.mxu0 %v756
      %v1035 = vpop.f32.mrf.mxu0
      %v1036 = vadd.f32 %v725, %v1035
      %v1037 = vpop.f32.mrf.mxu0
      %1038 = vmatprep.mubr.f32.mxu0 0.0
      %1039 = vmatmul.mubr.f32.gmra.mxu0 %v759
      %v1040 = vpop.f32.mrf.mxu0
      %v1041 = vadd.f32 %v725, %v1040
      %v1042 = vpop.f32.mrf.mxu0
      %1043 = vmatprep.mubr.f32.mxu0 0.0
      %1044 = vmatmul.mubr.f32.gmra.mxu0 %v762
      %v1045 = vpop.f32.mrf.mxu0
      %v1046 = vadd.f32 %v725, %v1045
      %v1047 = vpop.f32.mrf.mxu0
      %1048 = vmatprep.mubr.f32.mxu0 0.0
      %1049 = vmatmul.mubr.f32.gmra.mxu0 %v765
      %v1050 = vpop.f32.mrf.mxu0
      %v1051 = vadd.f32 %v725, %v1050
      %v1052 = vpop.f32.mrf.mxu0
      %1053 = vmatprep.mubr.f32.mxu0 0.0
      %1054 = vmatmul.mubr.f32.gmra.mxu0 %v768
      %v1055 = vpop.f32.mrf.mxu0
      %v1056 = vadd.f32 %v725, %v1055
      %v1057 = vpop.f32.mrf.mxu0
      %1058 = vmatprep.mubr.f32.mxu0 0.0
      %1059 = vmatmul.mubr.f32.gmra.mxu0 %v771
      %v1060 = vpop.f32.mrf.mxu0
      %v1061 = vadd.f32 %v725, %v1060
      %v1062 = vpop.f32.mrf.mxu0
      %1063 = vmatprep.mubr.f32.mxu0 0.0
      %1064 = vmatmul.mubr.f32.gmra.mxu0 %v774
      %v1065 = vpop.f32.mrf.mxu0
      %v1066 = vadd.f32 %v725, %v1065
      %v1067 = vpop.f32.mrf.mxu0
      %1068 = vmatprep.mubr.f32.mxu0 0.0
      %1069 = vmatmul.mubr.f32.gmra.mxu0 %v777
      %v1070 = vpop.f32.mrf.mxu0
      %v1071 = vadd.f32 %v725, %v1070
      %v1072 = vpop.f32.mrf.mxu0
      %1073 = vmatprep.mubr.f32.mxu0 0.0
      %1074 = vmatmul.mubr.f32.gmra.mxu0 %v780
      %v1075 = vpop.f32.mrf.mxu0
      %v1076 = vadd.f32 %v725, %v1075
      %v1077 = vpop.f32.mrf.mxu0
      %1078 = vmatprep.mubr.f32.mxu0 0.0
      %1079 = vmatmul.mubr.f32.gmra.mxu0 %v783
      %v1080 = vpop.f32.mrf.mxu0
      %v1081 = vadd.f32 %v725, %v1080
      %v1082 = vpop.f32.mrf.mxu0
      %1083 = vmatprep.mubr.f32.mxu0 0.0
      %1084 = vmatmul.mubr.f32.gmra.mxu0 %v786
      %v1085 = vpop.f32.mrf.mxu0
      %v1086 = vadd.f32 %v725, %v1085
      %v1087 = vpop.f32.mrf.mxu0
      %1088 = vmatprep.mubr.f32.mxu0 0.0
      %1089 = vmatmul.mubr.f32.gmra.mxu0 %v789
      %v1090 = vpop.f32.mrf.mxu0
      %v1091 = vadd.f32 %v725, %v1090
      %v1092 = vpop.f32.mrf.mxu0
      %1093 = vmatprep.mubr.f32.mxu0 0.0
      %1094 = vmatmul.mubr.f32.gmra.mxu0 %v792
      %v1095 = vpop.f32.mrf.mxu0
      %v1096 = vadd.f32 %v725, %v1095
      %v1097 = vpop.f32.mrf.mxu0
      %1098 = vmatprep.mubr.f32.mxu0 0.0
      %1099 = vmatmul.mubr.f32.gmra.mxu0 %v795
      %v1100 = vpop.f32.mrf.mxu0
      %v1101 = vadd.f32 %v725, %v1100
      %v1102 = vpop.f32.mrf.mxu0
      %1103 = vmatprep.mubr.f32.mxu0 0.0
      %1104 = vmatmul.mubr.f32.gmra.mxu0 %v798
      %v1105 = vpop.f32.mrf.mxu0
      %v1106 = vadd.f32 %v725, %v1105
      %v1107 = vpop.f32.mrf.mxu0
      %1108 = vmatprep.mubr.f32.mxu0 0.0
      %1109 = vmatmul.mubr.f32.gmra.mxu0 %v801
      %v1110 = vpop.f32.mrf.mxu0
      %v1111 = vadd.f32 %v725, %v1110
      %v1112 = vpop.f32.mrf.mxu0
      %1113 = vmatprep.mubr.f32.mxu0 0.0
      %1114 = vmatmul.mubr.f32.gmra.mxu0 %v804
      %v1115 = vpop.f32.mrf.mxu0
      %v1116 = vadd.f32 %v725, %v1115
      %v1117 = vpop.f32.mrf.mxu0
      %1118 = vmatprep.mubr.f32.mxu0 0.0
      %1119 = vmatmul.mubr.f32.gmra.mxu0 %v807
      %v1120 = vpop.f32.mrf.mxu0
      %v1121 = vadd.f32 %v725, %v1120
      %v1122 = vpop.f32.mrf.mxu0
      %1123 = vmatprep.mubr.f32.mxu0 0.0
      %1124 = vmatmul.mubr.f32.gmra.mxu0 %v810
      %v1125 = vpop.f32.mrf.mxu0
      %v1126 = vadd.f32 %v725, %v1125
      %v1127 = vpop.f32.mrf.mxu0
      %1128 = vmatprep.mubr.f32.mxu0 0.0
      %1129 = vmatmul.mubr.f32.gmra.mxu0 %v813
      %v1130 = vpop.f32.mrf.mxu0
      %v1131 = vadd.f32 %v725, %v1130
      %v1132 = vpop.f32.mrf.mxu0
      %1133 = vmatprep.mubr.f32.mxu0 0.0
      %1134 = vmatmul.mubr.f32.gmra.mxu0 %v816
      %v1135 = vpop.f32.mrf.mxu0
      %v1136 = vadd.f32 %v725, %v1135
      %v1137 = vpop.f32.mrf.mxu0
      %1138 = vmatprep.mubr.f32.mxu0 0.0
      %1139 = vmatmul.mubr.f32.gmra.mxu0 %v819
      %v1140 = vpop.f32.mrf.mxu0
      %v1141 = vadd.f32 %v725, %v1140
      %v1142 = vpop.f32.mrf.mxu0
      %1143 = vmatprep.mubr.f32.mxu0 0.0
      %1144 = vmatmul.mubr.f32.gmra.mxu0 %v822
      %v1145 = vpop.f32.mrf.mxu0
      %v1146 = vadd.f32 %v725, %v1145
      %v1147 = vpop.f32.mrf.mxu0
      %1148 = vmatprep.mubr.f32.mxu0 0.0
      %1149 = vmatmul.mubr.f32.gmra.mxu0 %v825
      %v1150 = vpop.f32.mrf.mxu0
      %v1151 = vadd.f32 %v725, %v1150
      %v1152 = vpop.f32.mrf.mxu0
      %1153 = vmatprep.mubr.f32.mxu0 0.0
      %1154 = vmatmul.mubr.f32.gmra.mxu0 %v828
      %v1155 = vpop.f32.mrf.mxu0
      %v1156 = vadd.f32 %v725, %v1155
      %v1157 = vpop.f32.mrf.mxu0
      %1158 = vmatprep.mubr.f32.mxu0 0.0
      %1159 = vmatmul.mubr.f32.gmra.mxu0 %v831
      %v1160 = vpop.f32.mrf.mxu0
      %v1161 = vadd.f32 %v725, %v1160
      %v1162 = vpop.f32.mrf.mxu0
      %1163 = vmatprep.mubr.f32.mxu0 0.0
      %1164 = vmatmul.mubr.f32.gmra.mxu0 %v834
      %v1165 = vpop.f32.mrf.mxu0
      %v1166 = vadd.f32 %v725, %v1165
      %v1167 = vpop.f32.mrf.mxu0
      %1168 = vmatprep.mubr.f32.mxu0 0.0
      %1169 = vmatmul.mubr.f32.gmra.mxu0 %v837
      %v1170 = vpop.f32.mrf.mxu0
      %v1171 = vadd.f32 %v725, %v1170
      %v1172 = vpop.f32.mrf.mxu0
      %1173 = vmatprep.mubr.f32.mxu0 0.0
      %1174 = vmatmul.mubr.f32.gmra.mxu0 %v840
      %v1175 = vpop.f32.mrf.mxu0
      %v1176 = vadd.f32 %v725, %v1175
      %v1177 = vpop.f32.mrf.mxu0
      %1178 = vmatprep.mubr.f32.mxu0 0.0
      %1179 = vmatmul.mubr.f32.gmra.mxu0 %v843
      %v1180 = vpop.f32.mrf.mxu0
      %v1181 = vadd.f32 %v725, %v1180
      %v1182 = vpop.f32.mrf.mxu0
      %1183 = vmatprep.mubr.f32.mxu0 0.0
      %1184 = vmatmul.mubr.f32.gmra.mxu0 %v846
      %v1185 = vpop.f32.mrf.mxu0
      %v1186 = vadd.f32 %v725, %v1185
      %v1187 = vpop.f32.mrf.mxu0
      %1188 = vmatprep.mubr.f32.mxu0 0.0
      %1189 = vmatmul.mubr.f32.gmra.mxu0 %v849
      %v1190 = vpop.f32.mrf.mxu0
      %v1191 = vadd.f32 %v725, %v1190
      %v1192 = vpop.f32.mrf.mxu0
      %1193 = vmatprep.mubr.f32.mxu0 0.0
      %1194 = vmatmul.mubr.f32.gmra.mxu0 %v852
      %v1195 = vpop.f32.mrf.mxu0
      %v1196 = vadd.f32 %v725, %v1195
      %v1197 = vpop.f32.mrf.mxu0
      %1198 = vmatprep.mubr.f32.mxu0 0.0
      %1199 = vmatmul.mubr.f32.gmra.mxu0 %v855
      %v1200 = vpop.f32.mrf.mxu0
      %v1201 = vadd.f32 %v725, %v1200
      %v1202 = vpop.f32.mrf.mxu0
      %1203 = vmatprep.mubr.f32.mxu0 0.0
      %1204 = vmatmul.mubr.f32.gmra.mxu0 %v858
      %v1205 = vpop.f32.mrf.mxu0
      %v1206 = vadd.f32 %v725, %v1205
      %v1207 = vpop.f32.mrf.mxu0
      %1208 = vmatprep.mubr.f32.mxu0 0.0
      %1209 = vmatmul.mubr.f32.gmra.mxu0 %v861
      %v1210 = vpop.f32.mrf.mxu0
      %v1211 = vadd.f32 %v725, %v1210
      %v1212 = vpop.f32.mrf.mxu0
      %1213 = vmatprep.mubr.f32.mxu0 0.0
      %1214 = vmatmul.mubr.f32.gmra.mxu0 %v864
      %v1215 = vpop.f32.mrf.mxu0
      %v1216 = vadd.f32 %v725, %v1215
      %v1217 = vpop.f32.mrf.mxu0
      %1218 = vmatprep.mubr.f32.mxu0 0.0
      %1219 = vmatmul.mubr.f32.gmra.mxu0 %v867
      %v1220 = vpop.f32.mrf.mxu0
      %v1221 = vadd.f32 %v725, %v1220
      %v1222 = vpop.f32.mrf.mxu0
      %1223 = vmatprep.mubr.f32.mxu0 0.0
      %1224 = vmatmul.mubr.f32.gmra.mxu0 %v870
      %v1225 = vpop.f32.mrf.mxu0
      %v1226 = vadd.f32 %v725, %v1225
      %v1227 = vpop.f32.mrf.mxu0
      %1228 = vmatprep.mubr.f32.mxu0 0.0
      %1229 = vmatmul.mubr.f32.gmra.mxu0 %v873
      %v1230 = vpop.f32.mrf.mxu0
      %v1231 = vadd.f32 %v725, %v1230
      %v1232 = vpop.f32.mrf.mxu0
      %1233 = vmatprep.mubr.f32.mxu0 0.0
      %1234 = vmatmul.mubr.f32.gmra.mxu0 %v876
      %v1235 = vpop.f32.mrf.mxu0
      %v1236 = vadd.f32 %v725, %v1235
      %v1237 = vpop.f32.mrf.mxu0
      %1238 = vmatprep.mubr.f32.mxu0 0.0
      %1239 = vmatmul.mubr.f32.gmra.mxu0 %v879
      %v1240 = vpop.f32.mrf.mxu0
      %v1241 = vadd.f32 %v725, %v1240
      %v1242 = vpop.f32.mrf.mxu0
      %1243 = vmatprep.mubr.f32.mxu0 0.0
      %1244 = vmatmul.mubr.f32.gmra.mxu0 %v882
      %v1245 = vpop.f32.mrf.mxu0
      %v1246 = vadd.f32 %v725, %v1245
      %v1247 = vpop.f32.mrf.mxu0
      %1248 = vmatprep.mubr.f32.mxu0 0.0
      %1249 = vmatmul.mubr.f32.gmra.mxu0 %v885
      %v1250 = vpop.f32.mrf.mxu0
      %v1251 = vadd.f32 %v725, %v1250
      %v1252 = vpop.f32.mrf.mxu0
      %1253 = vmatprep.mubr.f32.mxu0 0.0
      %1254 = vmatmul.mubr.f32.gmra.mxu0 %v888
      %v1255 = vpop.f32.mrf.mxu0
      %v1256 = vadd.f32 %v725, %v1255
      %v1257 = vpop.f32.mrf.mxu0
      %1258 = vmatprep.mubr.f32.mxu0 0.0
      %1259 = vmatmul.mubr.f32.gmra.mxu0 %v891
      %v1260 = vpop.f32.mrf.mxu0
      %v1261 = vadd.f32 %v725, %v1260
      %v1262 = vpop.f32.mrf.mxu0
      %1263 = vmatprep.mubr.f32.mxu0 0.0
      %1264 = vmatmul.mubr.f32.gmra.mxu0 %v894
      %v1265 = vpop.f32.mrf.mxu0
      %v1266 = vadd.f32 %v725, %v1265
      %v1267 = vpop.f32.mrf.mxu0
      %1268 = vmatprep.mubr.f32.mxu0 0.0
      %1269 = vmatmul.mubr.f32.gmra.mxu0 %v897
      %v1270 = vpop.f32.mrf.mxu0
      %v1271 = vadd.f32 %v725, %v1270
      %v1272 = vpop.f32.mrf.mxu0
      %1273 = vmatprep.mubr.f32.mxu0 0.0
      %1274 = vmatmul.mubr.f32.gmra.mxu0 %v900
      %v1275 = vpop.f32.mrf.mxu0
      %v1276 = vadd.f32 %v725, %v1275
      %v1277 = vpop.f32.mrf.mxu0
      %1278 = vmatprep.mubr.f32.mxu0 0.0
      %1279 = vmatmul.mubr.f32.gmra.mxu0 %v903
      %v1280 = vpop.f32.mrf.mxu0
      %v1281 = vadd.f32 %v725, %v1280
      %v1282 = vpop.f32.mrf.mxu0
      %1283 = vmatprep.mubr.f32.mxu0 0.0
      %1284 = vmatmul.mubr.f32.gmra.mxu0 %v906
      %v1285 = vpop.f32.mrf.mxu0
      %v1286 = vadd.f32 %v725, %v1285
      %v1287 = vpop.f32.mrf.mxu0
      %1288 = vmatprep.mubr.f32.mxu0 0.0
      %1289 = vmatmul.mubr.f32.gmra.mxu0 %v909
      %v1290 = vpop.f32.mrf.mxu0
      %v1291 = vadd.f32 %v725, %v1290
      %v1292 = vpop.f32.mrf.mxu0
      %1293 = vmatprep.mubr.f32.mxu0 0.0
      %1294 = vmatmul.mubr.f32.gmra.mxu0 %v912
      %v1295 = vpop.f32.mrf.mxu0
      %v1296 = vadd.f32 %v725, %v1295
      %v1297 = vpop.f32.mrf.mxu0
      %1298 = vmatprep.mubr.f32.mxu0 0.0
      %1299 = vmatmul.mubr.f32.gmra.mxu0 %v915
      %v1300 = vpop.f32.mrf.mxu0
      %v1301 = vadd.f32 %v725, %v1300
      %v1302 = vpop.f32.mrf.mxu0
      %1303 = vmatprep.mubr.f32.mxu0 0.0
      %1304 = vmatmul.mubr.f32.gmra.mxu0 %v918
      %v1305 = vpop.f32.mrf.mxu0
      %v1306 = vadd.f32 %v725, %v1305
      %v1307 = vpop.f32.mrf.mxu0
      %1308 = vdwg.mxu0
      %v1309 = vmax.f32 %v991, 0.0
      %v1310 = vmax.f32 %v996, 0.0
      %v1311 = vmax.f32 %v1001, 0.0
      %v1312 = vmax.f32 %v1006, 0.0
      %v1313 = vmax.f32 %v1011, 0.0
      %v1314 = vmax.f32 %v1016, 0.0
      %v1315 = vmax.f32 %v1021, 0.0
      %v1316 = vmax.f32 %v1026, 0.0
      %v1317 = vmax.f32 %v1031, 0.0
      %v1318 = vmax.f32 %v1036, 0.0
      %v1319 = vmax.f32 %v1041, 0.0
      %v1320 = vmax.f32 %v1046, 0.0
      %v1321 = vmax.f32 %v1051, 0.0
      %v1322 = vmax.f32 %v1056, 0.0
      %v1323 = vmax.f32 %v1061, 0.0
      %v1324 = vmax.f32 %v1066, 0.0
      %v1325 = vmax.f32 %v1071, 0.0
      %v1326 = vmax.f32 %v1076, 0.0
      %v1327 = vmax.f32 %v1081, 0.0
      %v1328 = vmax.f32 %v1086, 0.0
      %v1329 = vmax.f32 %v1091, 0.0
      %v1330 = vmax.f32 %v1096, 0.0
      %v1331 = vmax.f32 %v1101, 0.0
      %v1332 = vmax.f32 %v1106, 0.0
      %v1333 = vmax.f32 %v1111, 0.0
      %v1334 = vmax.f32 %v1116, 0.0
      %v1335 = vmax.f32 %v1121, 0.0
      %v1336 = vmax.f32 %v1126, 0.0
      %v1337 = vmax.f32 %v1131, 0.0
      %v1338 = vmax.f32 %v1136, 0.0
      %v1339 = vmax.f32 %v1141, 0.0
      %v1340 = vmax.f32 %v1146, 0.0
      %v1341 = vmax.f32 %v1151, 0.0
      %v1342 = vmax.f32 %v1156, 0.0
      %v1343 = vmax.f32 %v1161, 0.0
      %v1344 = vmax.f32 %v1166, 0.0
      %v1345 = vmax.f32 %v1171, 0.0
      %v1346 = vmax.f32 %v1176, 0.0
      %v1347 = vmax.f32 %v1181, 0.0
      %v1348 = vmax.f32 %v1186, 0.0
      %v1349 = vmax.f32 %v1191, 0.0
      %v1350 = vmax.f32 %v1196, 0.0
      %v1351 = vmax.f32 %v1201, 0.0
      %v1352 = vmax.f32 %v1206, 0.0
      %v1353 = vmax.f32 %v1211, 0.0
      %v1354 = vmax.f32 %v1216, 0.0
      %v1355 = vmax.f32 %v1221, 0.0
      %v1356 = vmax.f32 %v1226, 0.0
      %v1357 = vmax.f32 %v1231, 0.0
      %v1358 = vmax.f32 %v1236, 0.0
      %v1359 = vmax.f32 %v1241, 0.0
      %v1360 = vmax.f32 %v1246, 0.0
      %v1361 = vmax.f32 %v1251, 0.0
      %v1362 = vmax.f32 %v1256, 0.0
      %v1363 = vmax.f32 %v1261, 0.0
      %v1364 = vmax.f32 %v1266, 0.0
      %v1365 = vmax.f32 %v1271, 0.0
      %v1366 = vmax.f32 %v1276, 0.0
      %v1367 = vmax.f32 %v1281, 0.0
      %v1368 = vmax.f32 %v1286, 0.0
      %v1369 = vmax.f32 %v1291, 0.0
      %v1370 = vmax.f32 %v1296, 0.0
      %v1371 = vmax.f32 %v1301, 0.0
      %v1372 = vmax.f32 %v1306, 0.0
      %vm1373 = vcmask 261120
      %v1374 = vsel %vm1373, %v1309, 0.0
      %v1375 = vsel %vm1373, %v1310, 0.0
      %v1376 = vadd.f32 %v1374, %v1375
      %v1377 = vsel %vm1373, %v1311, 0.0
      %v1378 = vadd.f32 %v1376, %v1377
      %v1379 = vsel %vm1373, %v1312, 0.0
      %v1380 = vadd.f32 %v1378, %v1379
      %v1381 = vsel %vm1373, %v1313, 0.0
      %v1382 = vadd.f32 %v1380, %v1381
      %v1383 = vsel %vm1373, %v1314, 0.0
      %v1384 = vadd.f32 %v1382, %v1383
      %v1385 = vsel %vm1373, %v1315, 0.0
      %v1386 = vadd.f32 %v1384, %v1385
      %v1387 = vsel %vm1373, %v1316, 0.0
      %v1388 = vadd.f32 %v1386, %v1387
      %v1389 = vsel %vm1373, %v1317, 0.0
      %v1390 = vadd.f32 %v1388, %v1389
      %v1391 = vsel %vm1373, %v1318, 0.0
      %v1392 = vadd.f32 %v1390, %v1391
      %v1393 = vsel %vm1373, %v1319, 0.0
      %v1394 = vadd.f32 %v1392, %v1393
      %v1395 = vsel %vm1373, %v1320, 0.0
      %v1396 = vadd.f32 %v1394, %v1395
      %v1397 = vsel %vm1373, %v1321, 0.0
      %v1398 = vadd.f32 %v1396, %v1397
      %v1399 = vsel %vm1373, %v1322, 0.0
      %v1400 = vadd.f32 %v1398, %v1399
      %v1401 = vsel %vm1373, %v1323, 0.0
      %v1402 = vadd.f32 %v1400, %v1401
      %v1403 = vsel %vm1373, %v1324, 0.0
      %v1404 = vadd.f32 %v1402, %v1403
      %v1405 = vsel %vm1373, %v1325, 0.0
      %v1406 = vadd.f32 %v1404, %v1405
      %v1407 = vsel %vm1373, %v1326, 0.0
      %v1408 = vadd.f32 %v1406, %v1407
      %v1409 = vsel %vm1373, %v1327, 0.0
      %v1410 = vadd.f32 %v1408, %v1409
      %v1411 = vsel %vm1373, %v1328, 0.0
      %v1412 = vadd.f32 %v1410, %v1411
      %v1413 = vsel %vm1373, %v1329, 0.0
      %v1414 = vadd.f32 %v1412, %v1413
      %v1415 = vsel %vm1373, %v1330, 0.0
      %v1416 = vadd.f32 %v1414, %v1415
      %v1417 = vsel %vm1373, %v1331, 0.0
      %v1418 = vadd.f32 %v1416, %v1417
      %v1419 = vsel %vm1373, %v1332, 0.0
      %v1420 = vadd.f32 %v1418, %v1419
      %v1421 = vsel %vm1373, %v1333, 0.0
      %v1422 = vadd.f32 %v1420, %v1421
      %v1423 = vsel %vm1373, %v1334, 0.0
      %v1424 = vadd.f32 %v1422, %v1423
      %v1425 = vsel %vm1373, %v1335, 0.0
      %v1426 = vadd.f32 %v1424, %v1425
      %v1427 = vsel %vm1373, %v1336, 0.0
      %v1428 = vadd.f32 %v1426, %v1427
      %v1429 = vsel %vm1373, %v1337, 0.0
      %v1430 = vadd.f32 %v1428, %v1429
      %v1431 = vsel %vm1373, %v1338, 0.0
      %v1432 = vadd.f32 %v1430, %v1431
      %v1433 = vsel %vm1373, %v1339, 0.0
      %v1434 = vadd.f32 %v1432, %v1433
      %v1435 = vsel %vm1373, %v1340, 0.0
      %v1436 = vadd.f32 %v1434, %v1435
      %v1437 = vrot.slane %v1436, 4
      %v1438 = vadd.f32 %v1436, %v1437
      %v1439 = vrot.slane %v1438, 2
      %v1440 = vadd.f32 %v1438, %v1439
      %v1441 = vrot.slane %v1440, 1
      %v1442 = vadd.f32 %v1440, %v1441
      %v1443 = vsel %vm1373, %v1341, 0.0
      %v1444 = vsel %vm1373, %v1342, 0.0
      %v1445 = vadd.f32 %v1443, %v1444
      %v1446 = vsel %vm1373, %v1343, 0.0
      %v1447 = vadd.f32 %v1445, %v1446
      %v1448 = vsel %vm1373, %v1344, 0.0
      %v1449 = vadd.f32 %v1447, %v1448
      %v1450 = vsel %vm1373, %v1345, 0.0
      %v1451 = vadd.f32 %v1449, %v1450
      %v1452 = vsel %vm1373, %v1346, 0.0
      %v1453 = vadd.f32 %v1451, %v1452
      %v1454 = vsel %vm1373, %v1347, 0.0
      %v1455 = vadd.f32 %v1453, %v1454
      %v1456 = vsel %vm1373, %v1348, 0.0
      %v1457 = vadd.f32 %v1455, %v1456
      %v1458 = vsel %vm1373, %v1349, 0.0
      %v1459 = vadd.f32 %v1457, %v1458
      %v1460 = vsel %vm1373, %v1350, 0.0
      %v1461 = vadd.f32 %v1459, %v1460
      %v1462 = vsel %vm1373, %v1351, 0.0
      %v1463 = vadd.f32 %v1461, %v1462
      %v1464 = vsel %vm1373, %v1352, 0.0
      %v1465 = vadd.f32 %v1463, %v1464
      %v1466 = vsel %vm1373, %v1353, 0.0
      %v1467 = vadd.f32 %v1465, %v1466
      %v1468 = vsel %vm1373, %v1354, 0.0
      %v1469 = vadd.f32 %v1467, %v1468
      %v1470 = vsel %vm1373, %v1355, 0.0
      %v1471 = vadd.f32 %v1469, %v1470
      %v1472 = vsel %vm1373, %v1356, 0.0
      %v1473 = vadd.f32 %v1471, %v1472
      %v1474 = vsel %vm1373, %v1357, 0.0
      %v1475 = vadd.f32 %v1473, %v1474
      %v1476 = vsel %vm1373, %v1358, 0.0
      %v1477 = vadd.f32 %v1475, %v1476
      %v1478 = vsel %vm1373, %v1359, 0.0
      %v1479 = vadd.f32 %v1477, %v1478
      %v1480 = vsel %vm1373, %v1360, 0.0
      %v1481 = vadd.f32 %v1479, %v1480
      %v1482 = vsel %vm1373, %v1361, 0.0
      %v1483 = vadd.f32 %v1481, %v1482
      %v1484 = vsel %vm1373, %v1362, 0.0
      %v1485 = vadd.f32 %v1483, %v1484
      %v1486 = vsel %vm1373, %v1363, 0.0
      %v1487 = vadd.f32 %v1485, %v1486
      %v1488 = vsel %vm1373, %v1364, 0.0
      %v1489 = vadd.f32 %v1487, %v1488
      %v1490 = vsel %vm1373, %v1365, 0.0
      %v1491 = vadd.f32 %v1489, %v1490
      %v1492 = vsel %vm1373, %v1366, 0.0
      %v1493 = vadd.f32 %v1491, %v1492
      %v1494 = vsel %vm1373, %v1367, 0.0
      %v1495 = vadd.f32 %v1493, %v1494
      %v1496 = vsel %vm1373, %v1368, 0.0
      %v1497 = vadd.f32 %v1495, %v1496
      %v1498 = vsel %vm1373, %v1369, 0.0
      %v1499 = vadd.f32 %v1497, %v1498
      %v1500 = vsel %vm1373, %v1370, 0.0
      %v1501 = vadd.f32 %v1499, %v1500
      %v1502 = vsel %vm1373, %v1371, 0.0
      %v1503 = vadd.f32 %v1501, %v1502
      %v1504 = vsel %vm1373, %v1372, 0.0
      %v1505 = vadd.f32 %v1503, %v1504
      %v1506 = vrot.slane %v1505, 4
      %v1507 = vadd.f32 %v1505, %v1506
      %v1508 = vrot.slane %v1507, 2
      %v1509 = vadd.f32 %v1507, %v1508
      %v1510 = vrot.slane %v1509, 1
      %v1511 = vadd.f32 %v1509, %v1510
      %v1512 = vrcp.pop 256.0
      %v1513 = vmul.f32 %v1442, %v1512
      %v1514 = vmul.f32 %v1511, %v1512
      %v1515 = vld [vmem:[%s3] sm:$0xff]
      %v1516 = vld [vmem:[%s3 + $0x8] sm:$0xff]
      %v1517 = vld [vmem:[%s3 + $0x10] sm:$0xff]
      %v1518 = vld [vmem:[%s3 + $0x18] sm:$0xff]
      %v1519 = vld [vmem:[%s4] sm:$0x1]
      %v1521 = vlaneseq
      %v1522 = vshrl.u32 %v1521, 7
      %v1523 = vsub.s32 0, %v1522
      %v1524 = vrot.slane %v1519, %v1523
      %vm1528 = vcmask 1041409
      %v1529 = vsel %vm1528, %v1514, %v1513
      %v1530 = vsel %vm1373, %v1529, 0
      %1532 = vmatprep.subr.mxu0 0.0
      %1533 = vmatpush1.msra.mxu0 0.0
      %1534 = vmatprep.subr.mxu0 0.0
      %1535 = vmatpush1.msra.mxu0 0.0
      %1536 = vmatprep.subr.mxu0 0.0
      %1537 = vmatpush1.msra.mxu0 0.0
      %1538 = vmatprep.subr.mxu0 0.0
      %1539 = vmatpush1.msra.mxu0 0.0
      %1540 = vmatprep.subr.mxu0 0.0
      %1541 = vmatpush1.msra.mxu0 0.0
      %1542 = vmatprep.subr.mxu0 0.0
      %1543 = vmatpush1.msra.mxu0 0.0
      %1544 = vmatprep.subr.mxu0 0.0
      %1545 = vmatpush1.msra.mxu0 0.0
      %1546 = vmatprep.subr.mxu0 0.0
      %1547 = vmatpush1.msra.mxu0 0.0
      %1548 = vmatprep.subr.mxu0 0.0
      %1549 = vmatpush1.msra.mxu0 0.0
      %1550 = vmatprep.subr.mxu0 0.0
      %1551 = vmatpush1.msra.mxu0 0.0
      %1552 = vmatprep.subr.mxu0 0.0
      %1553 = vmatpush1.msra.mxu0 0.0
      %1554 = vmatprep.subr.mxu0 0.0
      %1555 = vmatpush1.msra.mxu0 0.0
      %1556 = vmatprep.subr.mxu0 0.0
      %1557 = vmatpush1.msra.mxu0 %v1518
      %1558 = vmatprep.subr.mxu0 0.0
      %1559 = vmatpush1.msra.mxu0 %v1517
      %1560 = vmatprep.subr.mxu0 0.0
      %1561 = vmatpush1.msra.mxu0 %v1516
      %1562 = vmatprep.subr.mxu0 0.0
      %1563 = vmatpush1.msra.mxu0 %v1515
      %1564 = vmatprep.subr.mxu0 0.0
      %1565 = vmatpush2.msra.mxu0 0.0
      %1566 = vmatprep.subr.mxu0 0.0
      %1567 = vmatpush2.msra.mxu0 0.0
      %1568 = vmatprep.subr.mxu0 0.0
      %1569 = vmatpush2.msra.mxu0 0.0
      %1570 = vmatprep.subr.mxu0 0.0
      %1571 = vmatpush2.msra.mxu0 0.0
      %1572 = vmatprep.subr.mxu0 0.0
      %1573 = vmatpush2.msra.mxu0 0.0
      %1574 = vmatprep.subr.mxu0 0.0
      %1575 = vmatpush2.msra.mxu0 0.0
      %1576 = vmatprep.subr.mxu0 0.0
      %1577 = vmatpush2.msra.mxu0 0.0
      %1578 = vmatprep.subr.mxu0 0.0
      %1579 = vmatpush2.msra.mxu0 0.0
      %1580 = vmatprep.subr.mxu0 0.0
      %1581 = vmatpush2.msra.mxu0 0.0
      %1582 = vmatprep.subr.mxu0 0.0
      %1583 = vmatpush2.msra.mxu0 0.0
      %1584 = vmatprep.subr.mxu0 0.0
      %1585 = vmatpush2.msra.mxu0 0.0
      %1586 = vmatprep.subr.mxu0 0.0
      %1587 = vmatpush2.msra.mxu0 0.0
      %1588 = vmatprep.subr.mxu0 0.0
      %1589 = vmatpush2.msra.mxu0 0.0
      %1590 = vmatprep.subr.mxu0 0.0
      %1591 = vmatpush2.msra.mxu0 0.0
      %1592 = vmatprep.subr.mxu0 0.0
      %1593 = vmatpush2.msra.mxu0 0.0
      %1594 = vmatprep.subr.mxu0 0.0
      %1595 = vmatpush2.msra.mxu0 0.0
      %1596 = vmatprep.mubr.f32.mxu0 0.0
      %1597 = vmatmul.mubr.f32.gmra.mxu0 %v1530
      %v1598 = vpop.f32.mrf.mxu0
      %v1599 = vadd.f32 %v1524, %v1598
      %v1600 = vpop.f32.mrf.mxu0
      %1601 = vdwg.mxu0
      %v1602 = vld [vmem:[%s5] sm:$0x1]
      %v1603 = vld [vmem:[%s6] sm:$0x1]
      %vm1604 = vcmask 517120
      %v1605 = vsel %vm1604, %v1599, 0.0
      %v1606 = vrot.slane %v1605, 4
      %v1607 = vadd.f32 %v1605, %v1606
      %v1608 = vrot.slane %v1607, 2
      %v1609 = vadd.f32 %v1607, %v1608
      %v1610 = vrot.slane %v1609, 1
      %v1611 = vadd.f32 %v1609, %v1610
      %v1612 = vrcp.pop 2.0
      %v1613 = vmul.f32 %v1611, %v1612
      %v1614 = vmul.f32 %v1599, %v1599
      %v1615 = vsel %vm1604, %v1614, 0.0
      %v1616 = vrot.slane %v1615, 4
      %v1617 = vadd.f32 %v1615, %v1616
      %v1618 = vrot.slane %v1617, 2
      %v1619 = vadd.f32 %v1617, %v1618
      %v1620 = vrot.slane %v1619, 1
      %v1621 = vadd.f32 %v1619, %v1620
      %v1622 = vmul.f32 %v1621, %v1612
      %v1623 = vmul.f32 %v1613, %v1613
      %v1624 = vsub.f32 %v1622, %v1623
      %v1625 = vadd.f32 %v1624, 1e-05
      %v1626 = vrsqrt.pop %v1625
      %v1627 = vmul.f32 %v1602, %v1626
      %v1628 = vmul.f32 %v1613, %v1627
      %v1629 = vsub.f32 %v1603, %v1628
      %v1631 = vlaneseq
      %v1632 = vshrl.u32 %v1631, 7
      %v1633 = vsub.s32 0, %v1632
      %v1634 = vrot.slane %v1627, %v1633
      %v1636 = vmul.f32 %v1599, %v1634
      %v1638 = vlaneseq
      %v1639 = vshrl.u32 %v1638, 7
      %v1640 = vsub.s32 0, %v1639
      %v1641 = vrot.slane %v1629, %v1640
      %v1643 = vadd.f32 %v1636, %v1641
      %v1644 = vmax.f32 %v1643, 0.0
      %v1645 = vld [vmem:[%s7] sm:$0xff]
      %v1646 = vld [vmem:[%s7 + $0x8] sm:$0xff]
      %v1647 = vld [vmem:[%s7 + $0x10] sm:$0xff]
      %v1648 = vld [vmem:[%s7 + $0x18] sm:$0xff]
      %v1649 = vld [vmem:[%s7 + $0x20] sm:$0xff]
      %v1650 = vld [vmem:[%s7 + $0x28] sm:$0xff]
      %v1651 = vld [vmem:[%s7 + $0x30] sm:$0xff]
      %v1652 = vld [vmem:[%s7 + $0x38] sm:$0xff]
      %v1653 = vld [vmem:[%s8] sm:$0x1]
      %v1655 = vlaneseq
      %v1656 = vshrl.u32 %v1655, 7
      %v1657 = vsub.s32 0, %v1656
      %v1658 = vrot.slane %v1653, %v1657
      %vm1660 = vcmask 523264
      %v1662 = vsel %vm1660, %v1644, 0
      %1664 = vmatprep.subr.mxu0 0.0
      %1665 = vmatpush1.msra.mxu0 0.0
      %1666 = vmatprep.subr.mxu0 0.0
      %1667 = vmatpush1.msra.mxu0 0.0
      %1668 = vmatprep.subr.mxu0 0.0
      %1669 = vmatpush1.msra.mxu0 0.0
      %1670 = vmatprep.subr.mxu0 0.0
      %1671 = vmatpush1.msra.mxu0 0.0
      %1672 = vmatprep.subr.mxu0 0.0
      %1673 = vmatpush1.msra.mxu0 0.0
      %1674 = vmatprep.subr.mxu0 0.0
      %1675 = vmatpush1.msra.mxu0 0.0
      %1676 = vmatprep.subr.mxu0 0.0
      %1677 = vmatpush1.msra.mxu0 0.0
      %1678 = vmatprep.subr.mxu0 0.0
      %1679 = vmatpush1.msra.mxu0 0.0
      %1680 = vmatprep.subr.mxu0 0.0
      %1681 = vmatpush1.msra.mxu0 %v1652
      %1682 = vmatprep.subr.mxu0 0.0
      %1683 = vmatpush1.msra.mxu0 %v1651
      %1684 = vmatprep.subr.mxu0 0.0
      %1685 = vmatpush1.msra.mxu0 %v1650
      %1686 = vmatprep.subr.mxu0 0.0
      %1687 = vmatpush1.msra.mxu0 %v1649
      %1688 = vmatprep.subr.mxu0 0.0
      %1689 = vmatpush1.msra.mxu0 %v1648
      %1690 = vmatprep.subr.mxu0 0.0
      %1691 = vmatpush1.msra.mxu0 %v1647
      %1692 = vmatprep.subr.mxu0 0.0
      %1693 = vmatpush1.msra.mxu0 %v1646
      %1694 = vmatprep.subr.mxu0 0.0
      %1695 = vmatpush1.msra.mxu0 %v1645
      %1696 = vmatprep.subr.mxu0 0.0
      %1697 = vmatpush2.msra.mxu0 0.0
      %1698 = vmatprep.subr.mxu0 0.0
      %1699 = vmatpush2.msra.mxu0 0.0
      %1700 = vmatprep.subr.mxu0 0.0
      %1701 = vmatpush2.msra.mxu0 0.0
      %1702 = vmatprep.subr.mxu0 0.0
      %1703 = vmatpush2.msra.mxu0 0.0
      %1704 = vmatprep.subr.mxu0 0.0
      %1705 = vmatpush2.msra.mxu0 0.0
      %1706 = vmatprep.subr.mxu0 0.0
      %1707 = vmatpush2.msra.mxu0 0.0
      %1708 = vmatprep.subr.mxu0 0.0
      %1709 = vmatpush2.msra.mxu0 0.0
      %1710 = vmatprep.subr.mxu0 0.0
      %1711 = vmatpush2.msra.mxu0 0.0
      %1712 = vmatprep.subr.mxu0 0.0
      %1713 = vmatpush2.msra.mxu0 0.0
      %1714 = vmatprep.subr.mxu0 0.0
      %1715 = vmatpush2.msra.mxu0 0.0
      %1716 = vmatprep.subr.mxu0 0.0
      %1717 = vmatpush2.msra.mxu0 0.0
      %1718 = vmatprep.subr.mxu0 0.0
      %1719 = vmatpush2.msra.mxu0 0.0
      %1720 = vmatprep.subr.mxu0 0.0
      %1721 = vmatpush2.msra.mxu0 0.0
      %1722 = vmatprep.subr.mxu0 0.0
      %1723 = vmatpush2.msra.mxu0 0.0
      %1724 = vmatprep.subr.mxu0 0.0
      %1725 = vmatpush2.msra.mxu0 0.0
      %1726 = vmatprep.subr.mxu0 0.0
      %1727 = vmatpush2.msra.mxu0 0.0
      %1728 = vmatprep.mubr.f32.mxu0 0.0
      %1729 = vmatmul.mubr.f32.gmra.mxu0 %v1662
      %v1730 = vpop.f32.mrf.mxu0
      %v1731 = vadd.f32 %v1658, %v1730
      %v1732 = vpop.f32.mrf.mxu0
      %1733 = vdwg.mxu0
      %v1734 = vld [vmem:[%s9] sm:$0x1]
      %v1735 = vld [vmem:[%s10] sm:$0x1]
      %v1736 = vsel %vm1604, %v1731, 0.0
      %v1737 = vrot.slane %v1736, 4
      %v1738 = vadd.f32 %v1736, %v1737
      %v1739 = vrot.slane %v1738, 2
      %v1740 = vadd.f32 %v1738, %v1739
      %v1741 = vrot.slane %v1740, 1
      %v1742 = vadd.f32 %v1740, %v1741
      %v1743 = vmul.f32 %v1742, %v1612
      %v1744 = vmul.f32 %v1731, %v1731
      %v1745 = vsel %vm1604, %v1744, 0.0
      %v1746 = vrot.slane %v1745, 4
      %v1747 = vadd.f32 %v1745, %v1746
      %v1748 = vrot.slane %v1747, 2
      %v1749 = vadd.f32 %v1747, %v1748
      %v1750 = vrot.slane %v1749, 1
      %v1751 = vadd.f32 %v1749, %v1750
      %v1752 = vmul.f32 %v1751, %v1612
      %v1753 = vmul.f32 %v1743, %v1743
      %v1754 = vsub.f32 %v1752, %v1753
      %v1755 = vadd.f32 %v1754, 1e-05
      %v1756 = vrsqrt.pop %v1755
      %v1757 = vmul.f32 %v1734, %v1756
      %v1758 = vmul.f32 %v1743, %v1757
      %v1759 = vsub.f32 %v1735, %v1758
      %v1761 = vlaneseq
      %v1762 = vshrl.u32 %v1761, 7
      %v1763 = vsub.s32 0, %v1762
      %v1764 = vrot.slane %v1757, %v1763
      %v1766 = vmul.f32 %v1731, %v1764
      %v1768 = vlaneseq
      %v1769 = vshrl.u32 %v1768, 7
      %v1770 = vsub.s32 0, %v1769
      %v1771 = vrot.slane %v1759, %v1770
      %v1773 = vadd.f32 %v1766, %v1771
      %v1774 = vmax.f32 %v1773, 0.0
      %v1775 = vld [vmem:[%s11] sm:$0xff]
      %v1776 = vld [vmem:[%s11 + $0x8] sm:$0xff]
      %v1777 = vld [vmem:[%s11 + $0x10] sm:$0xff]
      %v1778 = vld [vmem:[%s11 + $0x18] sm:$0xff]
      %v1779 = vld [vmem:[%s11 + $0x20] sm:$0xff]
      %v1780 = vld [vmem:[%s11 + $0x28] sm:$0xff]
      %v1781 = vld [vmem:[%s11 + $0x30] sm:$0xff]
      %v1782 = vld [vmem:[%s11 + $0x38] sm:$0xff]
      %v1783 = vld [vmem:[%s12] sm:$0x1]
      %v1785 = vlaneseq
      %v1786 = vshrl.u32 %v1785, 7
      %v1787 = vsub.s32 0, %v1786
      %v1788 = vrot.slane %v1783, %v1787
      %v1791 = vsel %vm1660, %v1774, 0
      %1793 = vmatprep.subr.mxu0 0.0
      %1794 = vmatpush1.msra.mxu0 0.0
      %1795 = vmatprep.subr.mxu0 0.0
      %1796 = vmatpush1.msra.mxu0 0.0
      %1797 = vmatprep.subr.mxu0 0.0
      %1798 = vmatpush1.msra.mxu0 0.0
      %1799 = vmatprep.subr.mxu0 0.0
      %1800 = vmatpush1.msra.mxu0 0.0
      %1801 = vmatprep.subr.mxu0 0.0
      %1802 = vmatpush1.msra.mxu0 0.0
      %1803 = vmatprep.subr.mxu0 0.0
      %1804 = vmatpush1.msra.mxu0 0.0
      %1805 = vmatprep.subr.mxu0 0.0
      %1806 = vmatpush1.msra.mxu0 0.0
      %1807 = vmatprep.subr.mxu0 0.0
      %1808 = vmatpush1.msra.mxu0 0.0
      %1809 = vmatprep.subr.mxu0 0.0
      %1810 = vmatpush1.msra.mxu0 %v1782
      %1811 = vmatprep.subr.mxu0 0.0
      %1812 = vmatpush1.msra.mxu0 %v1781
      %1813 = vmatprep.subr.mxu0 0.0
      %1814 = vmatpush1.msra.mxu0 %v1780
      %1815 = vmatprep.subr.mxu0 0.0
      %1816 = vmatpush1.msra.mxu0 %v1779
      %1817 = vmatprep.subr.mxu0 0.0
      %1818 = vmatpush1.msra.mxu0 %v1778
      %1819 = vmatprep.subr.mxu0 0.0
      %1820 = vmatpush1.msra.mxu0 %v1777
      %1821 = vmatprep.subr.mxu0 0.0
      %1822 = vmatpush1.msra.mxu0 %v1776
      %1823 = vmatprep.subr.mxu0 0.0
      %1824 = vmatpush1.msra.mxu0 %v1775
      %1825 = vmatprep.subr.mxu0 0.0
      %1826 = vmatpush2.msra.mxu0 0.0
      %1827 = vmatprep.subr.mxu0 0.0
      %1828 = vmatpush2.msra.mxu0 0.0
      %1829 = vmatprep.subr.mxu0 0.0
      %1830 = vmatpush2.msra.mxu0 0.0
      %1831 = vmatprep.subr.mxu0 0.0
      %1832 = vmatpush2.msra.mxu0 0.0
      %1833 = vmatprep.subr.mxu0 0.0
      %1834 = vmatpush2.msra.mxu0 0.0
      %1835 = vmatprep.subr.mxu0 0.0
      %1836 = vmatpush2.msra.mxu0 0.0
      %1837 = vmatprep.subr.mxu0 0.0
      %1838 = vmatpush2.msra.mxu0 0.0
      %1839 = vmatprep.subr.mxu0 0.0
      %1840 = vmatpush2.msra.mxu0 0.0
      %1841 = vmatprep.subr.mxu0 0.0
      %1842 = vmatpush2.msra.mxu0 0.0
      %1843 = vmatprep.subr.mxu0 0.0
      %1844 = vmatpush2.msra.mxu0 0.0
      %1845 = vmatprep.subr.mxu0 0.0
      %1846 = vmatpush2.msra.mxu0 0.0
      %1847 = vmatprep.subr.mxu0 0.0
      %1848 = vmatpush2.msra.mxu0 0.0
      %1849 = vmatprep.subr.mxu0 0.0
      %1850 = vmatpush2.msra.mxu0 0.0
      %1851 = vmatprep.subr.mxu0 0.0
      %1852 = vmatpush2.msra.mxu0 0.0
      %1853 = vmatprep.subr.mxu0 0.0
      %1854 = vmatpush2.msra.mxu0 0.0
      %1855 = vmatprep.subr.mxu0 0.0
      %1856 = vmatpush2.msra.mxu0 0.0
      %1857 = vmatprep.mubr.f32.mxu0 0.0
      %1858 = vmatmul.mubr.f32.gmra.mxu0 %v1791
      %v1859 = vpop.f32.mrf.mxu0
      %v1860 = vadd.f32 %v1788, %v1859
      %v1861 = vpop.f32.mrf.mxu0
      %1862 = vdwg.mxu0
      %v1863 = vld [vmem:[%s13] sm:$0x1]
      %v1864 = vld [vmem:[%s14] sm:$0x1]
      %v1865 = vsel %vm1604, %v1860, 0.0
      %v1866 = vrot.slane %v1865, 4
      %v1867 = vadd.f32 %v1865, %v1866
      %v1868 = vrot.slane %v1867, 2
      %v1869 = vadd.f32 %v1867, %v1868
      %v1870 = vrot.slane %v1869, 1
      %v1871 = vadd.f32 %v1869, %v1870
      %v1872 = vmul.f32 %v1871, %v1612
      %v1873 = vmul.f32 %v1860, %v1860
      %v1874 = vsel %vm1604, %v1873, 0.0
      %v1875 = vrot.slane %v1874, 4
      %v1876 = vadd.f32 %v1874, %v1875
      %v1877 = vrot.slane %v1876, 2
      %v1878 = vadd.f32 %v1876, %v1877
      %v1879 = vrot.slane %v1878, 1
      %v1880 = vadd.f32 %v1878, %v1879
      %v1881 = vmul.f32 %v1880, %v1612
      %v1882 = vmul.f32 %v1872, %v1872
      %v1883 = vsub.f32 %v1881, %v1882
      %v1884 = vadd.f32 %v1883, 1e-05
      %v1885 = vrsqrt.pop %v1884
      %v1886 = vmul.f32 %v1863, %v1885
      %v1887 = vmul.f32 %v1872, %v1886
      %v1888 = vsub.f32 %v1864, %v1887
      %v1890 = vlaneseq
      %v1891 = vshrl.u32 %v1890, 7
      %v1892 = vsub.s32 0, %v1891
      %v1893 = vrot.slane %v1886, %v1892
      %v1895 = vmul.f32 %v1860, %v1893
      %v1897 = vlaneseq
      %v1898 = vshrl.u32 %v1897, 7
      %v1899 = vsub.s32 0, %v1898
      %v1900 = vrot.slane %v1888, %v1899
      %v1902 = vadd.f32 %v1895, %v1900
      %v1903 = vld [vmem:[%s15] sm:$0xff]
      %v1904 = vld [vmem:[%s15 + $0x8] sm:$0xff]
      %v1905 = vld [vmem:[%s15 + $0x10] sm:$0xff]
      %v1906 = vld [vmem:[%s15 + $0x18] sm:$0xff]
      %v1907 = vld [vmem:[%s15 + $0x20] sm:$0xff]
      %v1908 = vld [vmem:[%s15 + $0x28] sm:$0xff]
      %v1909 = vld [vmem:[%s15 + $0x30] sm:$0xff]
      %v1910 = vld [vmem:[%s15 + $0x38] sm:$0xff]
      %v1911 = vld [vmem:[%s16] sm:$0x1]
      %v1913 = vlaneseq
      %v1914 = vshrl.u32 %v1913, 7
      %v1915 = vsub.s32 0, %v1914
      %v1916 = vrot.slane %v1911, %v1915
      %v1919 = vsel %vm1660, %v1902, 0
      %1921 = vmatprep.subr.mxu0 0.0
      %1922 = vmatpush1.msra.mxu0 0.0
      %1923 = vmatprep.subr.mxu0 0.0
      %1924 = vmatpush1.msra.mxu0 0.0
      %1925 = vmatprep.subr.mxu0 0.0
      %1926 = vmatpush1.msra.mxu0 0.0
      %1927 = vmatprep.subr.mxu0 0.0
      %1928 = vmatpush1.msra.mxu0 0.0
      %1929 = vmatprep.subr.mxu0 0.0
      %1930 = vmatpush1.msra.mxu0 0.0
      %1931 = vmatprep.subr.mxu0 0.0
      %1932 = vmatpush1.msra.mxu0 0.0
      %1933 = vmatprep.subr.mxu0 0.0
      %1934 = vmatpush1.msra.mxu0 0.0
      %1935 = vmatprep.subr.mxu0 0.0
      %1936 = vmatpush1.msra.mxu0 0.0
      %1937 = vmatprep.subr.mxu0 0.0
      %1938 = vmatpush1.msra.mxu0 %v1910
      %1939 = vmatprep.subr.mxu0 0.0
      %1940 = vmatpush1.msra.mxu0 %v1909
      %1941 = vmatprep.subr.mxu0 0.0
      %1942 = vmatpush1.msra.mxu0 %v1908
      %1943 = vmatprep.subr.mxu0 0.0
      %1944 = vmatpush1.msra.mxu0 %v1907
      %1945 = vmatprep.subr.mxu0 0.0
      %1946 = vmatpush1.msra.mxu0 %v1906
      %1947 = vmatprep.subr.mxu0 0.0
      %1948 = vmatpush1.msra.mxu0 %v1905
      %1949 = vmatprep.subr.mxu0 0.0
      %1950 = vmatpush1.msra.mxu0 %v1904
      %1951 = vmatprep.subr.mxu0 0.0
      %1952 = vmatpush1.msra.mxu0 %v1903
      %1953 = vmatprep.subr.mxu0 0.0
      %1954 = vmatpush2.msra.mxu0 0.0
      %1955 = vmatprep.subr.mxu0 0.0
      %1956 = vmatpush2.msra.mxu0 0.0
      %1957 = vmatprep.subr.mxu0 0.0
      %1958 = vmatpush2.msra.mxu0 0.0
      %1959 = vmatprep.subr.mxu0 0.0
      %1960 = vmatpush2.msra.mxu0 0.0
      %1961 = vmatprep.subr.mxu0 0.0
      %1962 = vmatpush2.msra.mxu0 0.0
      %1963 = vmatprep.subr.mxu0 0.0
      %1964 = vmatpush2.msra.mxu0 0.0
      %1965 = vmatprep.subr.mxu0 0.0
      %1966 = vmatpush2.msra.mxu0 0.0
      %1967 = vmatprep.subr.mxu0 0.0
      %1968 = vmatpush2.msra.mxu0 0.0
      %1969 = vmatprep.subr.mxu0 0.0
      %1970 = vmatpush2.msra.mxu0 0.0
      %1971 = vmatprep.subr.mxu0 0.0
      %1972 = vmatpush2.msra.mxu0 0.0
      %1973 = vmatprep.subr.mxu0 0.0
      %1974 = vmatpush2.msra.mxu0 0.0
      %1975 = vmatprep.subr.mxu0 0.0
      %1976 = vmatpush2.msra.mxu0 0.0
      %1977 = vmatprep.subr.mxu0 0.0
      %1978 = vmatpush2.msra.mxu0 0.0
      %1979 = vmatprep.subr.mxu0 0.0
      %1980 = vmatpush2.msra.mxu0 0.0
      %1981 = vmatprep.subr.mxu0 0.0
      %1982 = vmatpush2.msra.mxu0 0.0
      %1983 = vmatprep.subr.mxu0 0.0
      %1984 = vmatpush2.msra.mxu0 0.0
      %1985 = vmatprep.mubr.f32.mxu0 0.0
      %1986 = vmatmul.mubr.f32.gmra.mxu0 %v1919
      %v1987 = vpop.f32.mrf.mxu0
      %v1988 = vadd.f32 %v1916, %v1987
      %v1989 = vpop.f32.mrf.mxu0
      %1990 = vdwg.mxu0
      %v1991 = vld [vmem:[%s17] sm:$0x1]
      %v1992 = vld [vmem:[%s18] sm:$0x1]
      %vm1993 = vcmask 254976
      %v1994 = vsel %vm1993, %v1988, 0.0
      %v1995 = vrot.slane %v1994, 4
      %v1996 = vadd.f32 %v1994, %v1995
      %v1997 = vrot.slane %v1996, 2
      %v1998 = vadd.f32 %v1996, %v1997
      %v1999 = vrot.slane %v1998, 1
      %v2000 = vadd.f32 %v1998, %v1999
      %v2001 = vmul.f32 %v2000, %v1612
      %v2002 = vmul.f32 %v1988, %v1988
      %v2003 = vsel %vm1993, %v2002, 0.0
      %v2004 = vrot.slane %v2003, 4
      %v2005 = vadd.f32 %v2003, %v2004
      %v2006 = vrot.slane %v2005, 2
      %v2007 = vadd.f32 %v2005, %v2006
      %v2008 = vrot.slane %v2007, 1
      %v2009 = vadd.f32 %v2007, %v2008
      %v2010 = vmul.f32 %v2009, %v1612
      %v2011 = vmul.f32 %v2001, %v2001
      %v2012 = vsub.f32 %v2010, %v2011
      %v2013 = vadd.f32 %v2012, 1e-05
      %v2014 = vrsqrt.pop %v2013
      %v2015 = vmul.f32 %v1991, %v2014
      %v2016 = vmul.f32 %v2001, %v2015
      %v2017 = vsub.f32 %v1992, %v2016
      %v2019 = vlaneseq
      %v2020 = vshrl.u32 %v2019, 7
      %v2021 = vsub.s32 0, %v2020
      %v2022 = vrot.slane %v2015, %v2021
      %v2024 = vmul.f32 %v1988, %v2022
      %v2026 = vlaneseq
      %v2027 = vshrl.u32 %v2026, 7
      %v2028 = vsub.s32 0, %v2027
      %v2029 = vrot.slane %v2017, %v2028
      %v2031 = vadd.f32 %v2024, %v2029
      %v2032 = vmax.f32 %v2031, 0.0
      %v2033 = vld [vmem:[%s19] sm:$0xff]
      %v2034 = vld [vmem:[%s19 + $0x8] sm:$0xff]
      %v2035 = vld [vmem:[%s19 + $0x10] sm:$0xff]
      %v2036 = vld [vmem:[%s19 + $0x18] sm:$0xff]
      %v2037 = vld [vmem:[%s20] sm:$0x1]
      %v2039 = vlaneseq
      %v2040 = vshrl.u32 %v2039, 7
      %v2041 = vsub.s32 0, %v2040
      %v2042 = vrot.slane %v2037, %v2041
      %v2045 = vsel %vm1373, %v2032, 0
      %2047 = vmatprep.subr.mxu0 0.0
      %2048 = vmatpush1.msra.mxu0 0.0
      %2049 = vmatprep.subr.mxu0 0.0
      %2050 = vmatpush1.msra.mxu0 0.0
      %2051 = vmatprep.subr.mxu0 0.0
      %2052 = vmatpush1.msra.mxu0 0.0
      %2053 = vmatprep.subr.mxu0 0.0
      %2054 = vmatpush1.msra.mxu0 0.0
      %2055 = vmatprep.subr.mxu0 0.0
      %2056 = vmatpush1.msra.mxu0 0.0
      %2057 = vmatprep.subr.mxu0 0.0
      %2058 = vmatpush1.msra.mxu0 0.0
      %2059 = vmatprep.subr.mxu0 0.0
      %2060 = vmatpush1.msra.mxu0 0.0
      %2061 = vmatprep.subr.mxu0 0.0
      %2062 = vmatpush1.msra.mxu0 0.0
      %2063 = vmatprep.subr.mxu0 0.0
      %2064 = vmatpush1.msra.mxu0 0.0
      %2065 = vmatprep.subr.mxu0 0.0
      %2066 = vmatpush1.msra.mxu0 0.0
      %2067 = vmatprep.subr.mxu0 0.0
      %2068 = vmatpush1.msra.mxu0 0.0
      %2069 = vmatprep.subr.mxu0 0.0
      %2070 = vmatpush1.msra.mxu0 0.0
      %2071 = vmatprep.subr.mxu0 0.0
      %2072 = vmatpush1.msra.mxu0 %v2036
      %2073 = vmatprep.subr.mxu0 0.0
      %2074 = vmatpush1.msra.mxu0 %v2035
      %2075 = vmatprep.subr.mxu0 0.0
      %2076 = vmatpush1.msra.mxu0 %v2034
      %2077 = vmatprep.subr.mxu0 0.0
      %2078 = vmatpush1.msra.mxu0 %v2033
      %2079 = vmatprep.subr.mxu0 0.0
      %2080 = vmatpush2.msra.mxu0 0.0
      %2081 = vmatprep.subr.mxu0 0.0
      %2082 = vmatpush2.msra.mxu0 0.0
      %2083 = vmatprep.subr.mxu0 0.0
      %2084 = vmatpush2.msra.mxu0 0.0
      %2085 = vmatprep.subr.mxu0 0.0
      %2086 = vmatpush2.msra.mxu0 0.0
      %2087 = vmatprep.subr.mxu0 0.0
      %2088 = vmatpush2.msra.mxu0 0.0
      %2089 = vmatprep.subr.mxu0 0.0
      %2090 = vmatpush2.msra.mxu0 0.0
      %2091 = vmatprep.subr.mxu0 0.0
      %2092 = vmatpush2.msra.mxu0 0.0
      %2093 = vmatprep.subr.mxu0 0.0
      %2094 = vmatpush2.msra.mxu0 0.0
      %2095 = vmatprep.subr.mxu0 0.0
      %2096 = vmatpush2.msra.mxu0 0.0
      %2097 = vmatprep.subr.mxu0 0.0
      %2098 = vmatpush2.msra.mxu0 0.0
      %2099 = vmatprep.subr.mxu0 0.0
      %2100 = vmatpush2.msra.mxu0 0.0
      %2101 = vmatprep.subr.mxu0 0.0
      %2102 = vmatpush2.msra.mxu0 0.0
      %2103 = vmatprep.subr.mxu0 0.0
      %2104 = vmatpush2.msra.mxu0 0.0
      %2105 = vmatprep.subr.mxu0 0.0
      %2106 = vmatpush2.msra.mxu0 0.0
      %2107 = vmatprep.subr.mxu0 0.0
      %2108 = vmatpush2.msra.mxu0 0.0
      %2109 = vmatprep.subr.mxu0 0.0
      %2110 = vmatpush2.msra.mxu0 0.0
      %2111 = vmatprep.mubr.f32.mxu0 0.0
      %2112 = vmatmul.mubr.f32.gmra.mxu0 %v2045
      %v2113 = vpop.f32.mrf.mxu0
      %v2114 = vadd.f32 %v2042, %v2113
      %v2115 = vpop.f32.mrf.mxu0
      %2116 = vdwg.mxu0
      %2118 = vrot.lane.b32.xlu0 %v2114, 64
      %v2119 = vpop.permute.xlu0 %2118
      %v2121 = vsel %vm1660, %v1902, %v2119
      %2122 = vst [vmem:[%s654] sm:$0x3] %v2121
      %p2123 = scmp.lt.s32.totalorder %s32, 1
      %s2124 = scalar_select %p2123, %s32, 1
      %s2125 = smul.addr %s2124, 2
      %s2126 = scalar_lea.vmem %s21, %s2125
      // Predicated region
      $region105: #{simsiam_forward.1} parent=103 // pred_check
        %p2127 = pneg %p496
      $region106: #{simsiam_forward.1} parent=103 // pred_check_branch
        %2129 = sbr.rel (%p2127) target = $region108
      $region107: #{simsiam_forward.1} parent=103 // pred_region
        _
      $region108: #{simsiam_forward.1} parent=103 // pred_fallthru
        _
    $region104: #{simsiam_forward.1} parent=5 // pred_fallthru
      _
    %p2130 = scmp.le.s32.totalorder 2, %s27
    // Predicated region
    $region109: #{simsiam_forward.1} parent=5 // pred_check
      %p2131 = pneg %p2130
    $region110: #{simsiam_forward.1} parent=5 // pred_check_branch
      %2133 = sbr.rel (%p2131) target = $region112
    $region111: #{simsiam_forward.1} parent=5 // pred_region
      %s2134 = ssub.s32 %s27, 2
      // Predicated region
      $region113: #{simsiam_forward.1} parent=111 // pred_check
        %p2135 = pneg %p502
      $region114: #{simsiam_forward.1} parent=111 // pred_check_branch
        %2137 = sbr.rel (%p2135) target = $region116
      $region115: #{simsiam_forward.1} parent=111 // pred_region
        %p2138 = scmp.lt.s32.totalorder %s33, 1
        %s2139 = scalar_select %p2138, %s33, 1
        %s2140 = smul.addr %s2139, 2
        %s2141 = scalar_lea.vmem %s21, %s2140
      $region116: #{simsiam_forward.1} parent=111 // pred_fallthru
        _
    $region112: #{simsiam_forward.1} parent=5 // pred_fallthru
      _
  $region6: #{simsiam_forward.1} parent=0 // loop_footer
    %s31 = sadd.s32 1, %s27
  $region7: #{simsiam_forward.1} parent=0 // loop_footer_branch
    %26 = sbr.rel target = $region3
  $region8: #{simsiam_forward.1} parent=0 // loop_exit
    _

</llo_original>
